<compile_context>
chip_gen: v7x
topology: tpu7x:2x2x1
jax: 0.10.0
libtpu: 0.0.40
codegen_flags: <defaults>
</compile_context>

<pallas_src>
import functools
import math

import jax
import jax.numpy as jnp
from jax.experimental import pallas as pl
from jax.experimental.pallas import tpu as pltpu


def pma_kernel(z_ref, at_ref, sb_ref, wvt_ref, bv_ref, mask_ref, wot_ref,
               res_ref, gamma_ref, beta_ref, out_ref, *,
               num_heads, k_seed, set_size):
    m, d = z_ref.shape                      # m = Tb * N rows of Z, D channels
    n = set_size
    tb = m // n
    r = num_heads * k_seed                  # r is h-major: r = h*K + k

    z2 = z_ref[...]                                                   # (Tb*N, D) bf16

    # --- scores for every (head, query) pair: ONE unbatched matmul -----------
    # A = scale * Q_h @ Wk_h is folded in the wrapper, so s = z @ A^T + sb gives
    # the per-head logits directly (no K projection, no per-head slicing).
    s2 = jnp.dot(z2, at_ref[...],
                 preferred_element_type=jnp.float32) + sb_ref[...]    # (Tb*N, R)
    s3 = s2.reshape(tb, n, r)               # minor dim unchanged -> free split
    st = jnp.swapaxes(s3, 1, 2)             # (Tb, R, N) minor-2D transpose

    # softmax over the set axis (lanes)
    st = st - jnp.max(st, axis=-1, keepdims=True)
    p = jnp.exp(st)
    p = p * pl.reciprocal(jnp.sum(p, axis=-1, keepdims=True), approx=True)

    # --- V projection: one matmul, bias folded, single bf16 cast -------------
    v2 = (jnp.dot(z2, wvt_ref[...], preferred_element_type=jnp.float32)
          + bv_ref[...]).astype(jnp.bfloat16)                         # (Tb*N, D)
    v3 = v2.reshape(tb, n, d)

    # --- context for all heads/queries: ONE b-batched dot_general ------------
    ctx = jnp.einsum('brn,bnd->brd', p.astype(jnp.bfloat16), v3,
                     preferred_element_type=jnp.float32)              # (Tb, R, D)

    # --- exact head recombination: 0/1 channel mask + leading-axis sum -------
    ctx4 = ctx.reshape(tb, num_heads, k_seed, d)                      # r = h*K + k
    ctx_c = jnp.sum(ctx4 * mask_ref[...], axis=1)                     # (Tb, K, D)

    # --- output projection + (bias + seed) residual --------------------------
    y = jnp.dot(ctx_c.reshape(tb * k_seed, d).astype(jnp.bfloat16), wot_ref[...],
                preferred_element_type=jnp.float32).reshape(tb, k_seed, d)
    resid = y + res_ref[...]                                          # + (bo + seed)

    # --- LayerNorm over D -----------------------------------------------------
    mean = jnp.mean(resid, axis=-1, keepdims=True)
    var = jnp.mean((resid - mean) ** 2, axis=-1, keepdims=True)
    normed = (resid - mean) * jax.lax.rsqrt(var + 1e-5)

    # --- lane-dense store: (Tb, K*D) slab, affine applied at full lane width --
    flat = jnp.concatenate([normed[:, k, :] for k in range(k_seed)], axis=-1)
    out_ref[...] = flat * gamma_ref[...] + beta_ref[...]


def _pick_block_b(batch, set_size):
    """Pick the batch block: ~256 MXU rows per step (v6e/v7x), >= 4 grid steps
    when possible (>= 2 per v7x TensorCore), divides B, sublane-dim 8-aligned."""
    row_target = 256
    want = max(1, -(-row_target // set_size))
    cap = max(1, batch // 4)
    target = max(1, min(batch, want, cap))
    valid = [t for t in range(1, batch + 1)
             if batch % t == 0 and (t % 8 == 0 or t == batch)]
    under = [t for t in valid if t <= target]
    return max(under) if under else min(valid)


def pma_forward(Z, params, num_heads, block_b=None):
    B, N, D = Z.shape
    K = params["seed"].shape[0]
    assert D % num_heads == 0
    hd = D // num_heads
    scale = 1.0 / math.sqrt(hd)
    R = num_heads * K

    if block_b is None:
        block_b = _pick_block_b(B, N)
    assert B % block_b == 0
    assert (block_b * N) % 8 == 0 or block_b == B

    wq, wk, wv = jnp.split(params["in_proj_weight"], 3, axis=0)       # each (D, D)
    bq, bk, bv = jnp.split(params["in_proj_bias"], 3)

    # Hoisted, batch-invariant Q projection folded with the K projection:
    #   s[b, n, (h,k)] = z[b,n,:] @ A[(h,k),:]^T + sb[(h,k)]
    #   A[(h,k), d]   = scale * sum_i q[k, h*hd+i] * wk[h*hd+i, d]
    q = params["seed"] @ wq.T + bq                                    # (K, D) f32
    qhk = q.reshape(K, num_heads, hd).transpose(1, 0, 2)              # (H, K, hd)
    wk_h = wk.reshape(num_heads, hd, D)                               # (H, hd, D)
    a = scale * jnp.einsum('hki,hid->hkd', qhk, wk_h)                 # (H, K, D)
    at = a.reshape(R, D).T.astype(jnp.bfloat16)                       # (D, R)
    sb = (scale * jnp.einsum('hki,hi->hk', qhk, bk.reshape(num_heads, hd))
          ).reshape(1, R).astype(jnp.float32)

    # V projection (pre-transposed) + bias row.
    wvt = wv.T.astype(jnp.bfloat16)                                   # (D, D)
    bv_row = bv.reshape(1, D).astype(jnp.float32)

    # Exact 0/1 head-channel mask used for head recombination.
    mask = (jnp.arange(D)[None, :] // hd ==
            jnp.arange(num_heads)[:, None]).astype(jnp.float32).reshape(num_heads, 1, D)

    # Output projection (pre-transposed) and the (bias + seed) residual term.
    wot = params["out_proj_weight"].T.astype(jnp.bfloat16)            # (D, D)
    res = (params["seed"] + params["out_proj_bias"][None]).astype(jnp.float32)  # (K, D)

    # LayerNorm affine, pre-flattened to the lane-dense (1, K*D) output layout.
    gamma_flat = jnp.tile(params["ln_weight"], K).reshape(1, K * D).astype(jnp.float32)
    beta_flat = jnp.tile(params["ln_bias"], K).reshape(1, K * D).astype(jnp.float32)

    # Z presented as dense (B*N, D) rows: exactly the KV-projection LHS layout.
    z2 = Z.reshape(B * N, D).astype(jnp.bfloat16)

    def full(shape):
        return pl.BlockSpec(shape, lambda b: (0,) * len(shape))

    kernel = functools.partial(pma_kernel, num_heads=num_heads, k_seed=K, set_size=N)

    # TODO(synk): for large D (O(10^3)) the (D, D) weights should be tiled over an
    # extra 'arbitrary' grid axis to respect v7x's 64 MiB VMEM.
    out_flat = pl.pallas_call(
        kernel,
        out_shape=jax.ShapeDtypeStruct((B, K * D), jnp.float32),
        grid=(B // block_b,),
        in_specs=[
            pl.BlockSpec((block_b * N, D), lambda b: (b, 0)),     # Z rows (bf16)
            full((D, R)), full((1, R)),                           # folded Q.Wk, score bias
            full((D, D)), full((1, D)),                           # Wv^T, bv
            full((num_heads, 1, D)),                              # head-channel mask
            full((D, D)), full((K, D)),                           # Wo^T, (bo + seed)
            full((1, K * D)), full((1, K * D)),                   # ln gamma/beta (flat)
        ],
        out_specs=pl.BlockSpec((block_b, K * D), lambda b: (b, 0)),
        compiler_params=pltpu.CompilerParams(
            dimension_semantics=("parallel",),
            vmem_limit_bytes=48 * 1024 * 1024),
    )(z2, at, sb, wvt, bv_row, mask, wot, res, gamma_flat, beta_flat)

    return out_flat.reshape(B, K, D)


def pma_reference(Z, params, num_heads):
    """Plain-JAX reference mirroring nn.MultiheadAttention + LayerNorm."""
    B, N, D = Z.shape
    K = params["seed"].shape[0]
    hd = D // num_heads
    scale = 1.0 / math.sqrt(hd)

    wq, wk, wv = jnp.split(params["in_proj_weight"], 3, axis=0)
    bq, bk, bv = jnp.split(params["in_proj_bias"], 3)

    S = jnp.broadcast_to(params["seed"][None], (B, K, D))
    q = S @ wq.T + bq                       # (B, K, D)
    k = Z @ wk.T + bk                       # (B, N, D)
    v = Z @ wv.T + bv                       # (B, N, D)

    q = q.reshape(B, K, num_heads, hd).transpose(0, 2, 1, 3)
    k = k.reshape(B, N, num_heads, hd).transpose(0, 2, 1, 3)
    v = v.reshape(B, N, num_heads, hd).transpose(0, 2, 1, 3)

    scores = jnp.einsum("bhkd,bhnd->bhkn", q, k) * scale
    p = jax.nn.softmax(scores, axis=-1)
    ctx = jnp.einsum("bhkn,bhnd->bhkd", p, v)
    ctx = ctx.transpose(0, 2, 1, 3).reshape(B, K, D)

    y = ctx @ params["out_proj_weight"].T + params["out_proj_bias"]
    r = y + S
    mean = jnp.mean(r, axis=-1, keepdims=True)
    var = jnp.mean((r - mean) ** 2, axis=-1, keepdims=True)
    normed = (r - mean) / jnp.sqrt(var + 1e-5)
    return normed * params["ln_weight"] + params["ln_bias"]


def init_params(key, d, k):
    """Deterministic synthetic parameters matching PMA.__init__ shapes."""
    k0, k1, k2, k3 = jax.random.split(key, 4)
    return {
        "seed": jax.random.normal(k0, (k, d), jnp.float32),            # (K, D)
        "in_proj_weight": 0.1 * jax.random.normal(k1, (3 * d, d), jnp.float32),
        "in_proj_bias": 0.05 * jax.random.normal(k2, (3 * d,), jnp.float32),
        "out_proj_weight": 0.1 * jax.random.normal(k3, (d, d), jnp.float32),
        "out_proj_bias": jnp.zeros((d,), jnp.float32),
        "ln_weight": jnp.ones((d,), jnp.float32),
        "ln_bias": jnp.zeros((d,), jnp.float32),
    }


if __name__ == "__main__":
    B, N, D, H, K = 32, 8, 32, 4, 4   # batch, set size, dim, heads, seed vectors

    key = jax.random.PRNGKey(0)
    kz, kp = jax.random.split(key)
    Z = jax.random.normal(kz, (B, N, D), jnp.float32)
    params = init_params(kp, D, K)

    out = jax.block_until_ready(pma_forward(Z, params, num_heads=H))
    ref = pma_reference(Z, params, num_heads=H)

    assert out.shape == (B, K, D)
    # bf16 MXU inputs with f32 accumulation -> compare at bf16-level tolerance.
    assert jnp.allclose(out, ref, rtol=2e-2, atol=2e-2), "mismatch vs reference"

    print("KERNEL_OK")
</pallas_src>

<mosaic_0001>
module attributes {stable_mosaic.version = 11 : i64} {
  func.func @pma_kernel(%arg0: i32, %arg1: memref<64x32xbf16, #tpu.memory_space<vmem>>, %arg2: memref<32x16xbf16, #tpu.memory_space<vmem>>, %arg3: memref<1x16xf32, #tpu.memory_space<vmem>>, %arg4: memref<32x32xbf16, #tpu.memory_space<vmem>>, %arg5: memref<1x32xf32, #tpu.memory_space<vmem>>, %arg6: memref<4x1x32xf32, #tpu.memory_space<vmem>>, %arg7: memref<32x32xbf16, #tpu.memory_space<vmem>>, %arg8: memref<4x32xf32, #tpu.memory_space<vmem>>, %arg9: memref<1x128xf32, #tpu.memory_space<vmem>>, %arg10: memref<1x128xf32, #tpu.memory_space<vmem>>, %arg11: memref<8x128xf32, #tpu.memory_space<vmem>>) attributes {dimension_semantics = [#tpu.dimension_semantics<parallel>], iteration_bounds = array<i64: 4>, scalar_prefetch = 0 : i64, scratch_operands = 0 : i64, tpu.core_type = #tpu.core_type<tc>, window_params = [{transform_indices = @transform_0, window_bounds = array<i64: 64, 32>}, {pipeline_mode = #tpu.pipeline_mode<synchronous>, transform_indices = @transform_1, window_bounds = array<i64: 32, 16>}, {pipeline_mode = #tpu.pipeline_mode<synchronous>, transform_indices = @transform_2, window_bounds = array<i64: 1, 16>}, {pipeline_mode = #tpu.pipeline_mode<synchronous>, transform_indices = @transform_3, window_bounds = array<i64: 32, 32>}, {pipeline_mode = #tpu.pipeline_mode<synchronous>, transform_indices = @transform_4, window_bounds = array<i64: 1, 32>}, {pipeline_mode = #tpu.pipeline_mode<synchronous>, transform_indices = @transform_5, window_bounds = array<i64: 4, 1, 32>}, {pipeline_mode = #tpu.pipeline_mode<synchronous>, transform_indices = @transform_6, window_bounds = array<i64: 32, 32>}, {pipeline_mode = #tpu.pipeline_mode<synchronous>, transform_indices = @transform_7, window_bounds = array<i64: 4, 32>}, {pipeline_mode = #tpu.pipeline_mode<synchronous>, transform_indices = @transform_8, window_bounds = array<i64: 1, 128>}, {pipeline_mode = #tpu.pipeline_mode<synchronous>, transform_indices = @transform_9, window_bounds = array<i64: 1, 128>}, {transform_indices = @transform_10, window_bounds = array<i64: 8, 128>}]} {
    %c0 = arith.constant 0 : index
    %c0_0 = arith.constant 0 : index
    %0 = vector.load %arg1[%c0, %c0_0] : memref<64x32xbf16, #tpu.memory_space<vmem>>, vector<64x32xbf16>
    %c0_1 = arith.constant 0 : index
    %c0_2 = arith.constant 0 : index
    %1 = vector.load %arg2[%c0_1, %c0_2] : memref<32x16xbf16, #tpu.memory_space<vmem>>, vector<32x16xbf16>
    %cst = arith.constant dense<0.000000e+00> : vector<64x16xf32>
    %2 = tpu.matmul %0, %1, %cst {dimension_numbers = #tpu.dot_dimension_numbers<[1], [0], [0], [1], [0, 0, 1, 1], [], []>} : vector<64x32xbf16>, vector<32x16xbf16>, vector<64x16xf32> -> vector<64x16xf32>
    %c0_3 = arith.constant 0 : index
    %c0_4 = arith.constant 0 : index
    %3 = vector.load %arg3[%c0_3, %c0_4] : memref<1x16xf32, #tpu.memory_space<vmem>>, vector<1x16xf32>
    %4 = vector.broadcast %3 : vector<1x16xf32> to vector<64x16xf32>
    %5 = arith.addf %2, %4 : vector<64x16xf32>
    %6 = vector.shape_cast %5 : vector<64x16xf32> to vector<8x8x16xf32>
    %7 = tpu.transpose %6, [0, 2, 1] : vector<8x8x16xf32> -> vector<8x16x8xf32>
    %cst_5 = arith.constant dense<0xFF800000> : vector<8x16xf32>
    %8 = vector.multi_reduction <maximumf>, %7, %cst_5 [2] : vector<8x16x8xf32> to vector<8x16xf32>
    %9 = vector.shape_cast %8 : vector<8x16xf32> to vector<8x16x1xf32>
    %10 = vector.broadcast %9 : vector<8x16x1xf32> to vector<8x16x8xf32>
    %11 = arith.subf %7, %10 : vector<8x16x8xf32>
    %12 = math.exp %11 : vector<8x16x8xf32>
    %cst_6 = arith.constant dense<0.000000e+00> : vector<8x16xf32>
    %13 = vector.multi_reduction <add>, %12, %cst_6 [2] : vector<8x16x8xf32> to vector<8x16xf32>
    %14 = vector.shape_cast %13 : vector<8x16xf32> to vector<8x16x1xf32>
    %15 = tpu.reciprocal %14 {approx = true} : vector<8x16x1xf32> -> vector<8x16x1xf32>
    %16 = vector.broadcast %15 : vector<8x16x1xf32> to vector<8x16x8xf32>
    %17 = arith.mulf %12, %16 : vector<8x16x8xf32>
    %c0_7 = arith.constant 0 : index
    %c0_8 = arith.constant 0 : index
    %18 = vector.load %arg4[%c0_7, %c0_8] : memref<32x32xbf16, #tpu.memory_space<vmem>>, vector<32x32xbf16>
    %cst_9 = arith.constant dense<0.000000e+00> : vector<64x32xf32>
    %19 = tpu.matmul %0, %18, %cst_9 {dimension_numbers = #tpu.dot_dimension_numbers<[1], [0], [0], [1], [0, 0, 1, 1], [], []>} : vector<64x32xbf16>, vector<32x32xbf16>, vector<64x32xf32> -> vector<64x32xf32>
    %c0_10 = arith.constant 0 : index
    %c0_11 = arith.constant 0 : index
    %20 = vector.load %arg5[%c0_10, %c0_11] : memref<1x32xf32, #tpu.memory_space<vmem>>, vector<1x32xf32>
    %21 = vector.broadcast %20 : vector<1x32xf32> to vector<64x32xf32>
    %22 = arith.addf %19, %21 : vector<64x32xf32>
    %23 = arith.truncf %22 : vector<64x32xf32> to vector<64x32xbf16>
    %24 = vector.shape_cast %23 : vector<64x32xbf16> to vector<8x8x32xbf16>
    %25 = arith.truncf %17 : vector<8x16x8xf32> to vector<8x16x8xbf16>
    "tpu.trace_start"() <{level = 10 : i32, message = "brn,bnd->brd"}> : () -> ()
    %cst_12 = arith.constant dense<0.000000e+00> : vector<8x16x32xf32>
    %26 = tpu.matmul %25, %24, %cst_12 {dimension_numbers = #tpu.dot_dimension_numbers<[2], [1], [1], [2], [0, 0, 0, 1, 1, 2], [0], [0]>} : vector<8x16x8xbf16>, vector<8x8x32xbf16>, vector<8x16x32xf32> -> vector<8x16x32xf32>
    "tpu.trace_stop"() : () -> ()
    %27 = vector.shape_cast %26 : vector<8x16x32xf32> to vector<8x4x4x32xf32>
    %c0_13 = arith.constant 0 : index
    %c0_14 = arith.constant 0 : index
    %c0_15 = arith.constant 0 : index
    %28 = vector.load %arg6[%c0_13, %c0_14, %c0_15] : memref<4x1x32xf32, #tpu.memory_space<vmem>>, vector<4x1x32xf32>
    %29 = vector.shape_cast %28 : vector<4x1x32xf32> to vector<1x4x1x32xf32>
    %30 = vector.broadcast %29 : vector<1x4x1x32xf32> to vector<8x4x4x32xf32>
    %31 = arith.mulf %27, %30 : vector<8x4x4x32xf32>
    %cst_16 = arith.constant dense<0.000000e+00> : vector<8x4x32xf32>
    %32 = vector.multi_reduction <add>, %31, %cst_16 [1] : vector<8x4x4x32xf32> to vector<8x4x32xf32>
    %33 = vector.shape_cast %32 : vector<8x4x32xf32> to vector<32x32xf32>
    %34 = arith.truncf %33 : vector<32x32xf32> to vector<32x32xbf16>
    %c0_17 = arith.constant 0 : index
    %c0_18 = arith.constant 0 : index
    %35 = vector.load %arg7[%c0_17, %c0_18] : memref<32x32xbf16, #tpu.memory_space<vmem>>, vector<32x32xbf16>
    %cst_19 = arith.constant dense<0.000000e+00> : vector<32x32xf32>
    %36 = tpu.matmul %34, %35, %cst_19 {dimension_numbers = #tpu.dot_dimension_numbers<[1], [0], [0], [1], [0, 0, 1, 1], [], []>} : vector<32x32xbf16>, vector<32x32xbf16>, vector<32x32xf32> -> vector<32x32xf32>
    %37 = vector.shape_cast %36 : vector<32x32xf32> to vector<8x4x32xf32>
    %c0_20 = arith.constant 0 : index
    %c0_21 = arith.constant 0 : index
    %38 = vector.load %arg8[%c0_20, %c0_21] : memref<4x32xf32, #tpu.memory_space<vmem>>, vector<4x32xf32>
    %39 = vector.shape_cast %38 : vector<4x32xf32> to vector<1x4x32xf32>
    %40 = vector.broadcast %39 : vector<1x4x32xf32> to vector<8x4x32xf32>
    %41 = arith.addf %37, %40 : vector<8x4x32xf32>
    %cst_22 = arith.constant dense<0.000000e+00> : vector<8x4xf32>
    %42 = vector.multi_reduction <add>, %41, %cst_22 [2] : vector<8x4x32xf32> to vector<8x4xf32>
    %43 = vector.shape_cast %42 : vector<8x4xf32> to vector<8x4x1xf32>
    %cst_23 = arith.constant 3.200000e+01 : f32
    %44 = vector.broadcast %cst_23 : f32 to vector<8x4x1xf32>
    %45 = arith.divf %43, %44 : vector<8x4x1xf32>
    %46 = vector.broadcast %45 : vector<8x4x1xf32> to vector<8x4x32xf32>
    %47 = arith.subf %41, %46 : vector<8x4x32xf32>
    %48 = arith.mulf %47, %47 : vector<8x4x32xf32>
    %cst_24 = arith.constant dense<0.000000e+00> : vector<8x4xf32>
    %49 = vector.multi_reduction <add>, %48, %cst_24 [2] : vector<8x4x32xf32> to vector<8x4xf32>
    %50 = vector.shape_cast %49 : vector<8x4xf32> to vector<8x4x1xf32>
    %cst_25 = arith.constant 3.200000e+01 : f32
    %51 = vector.broadcast %cst_25 : f32 to vector<8x4x1xf32>
    %52 = arith.divf %50, %51 : vector<8x4x1xf32>
    %53 = vector.broadcast %45 : vector<8x4x1xf32> to vector<8x4x32xf32>
    %54 = arith.subf %41, %53 : vector<8x4x32xf32>
    %cst_26 = arith.constant 9.99999974E-6 : f32
    %55 = vector.broadcast %cst_26 : f32 to vector<8x4x1xf32>
    %56 = arith.addf %52, %55 : vector<8x4x1xf32>
    %57 = math.rsqrt %56 : vector<8x4x1xf32>
    %58 = vector.broadcast %57 : vector<8x4x1xf32> to vector<8x4x32xf32>
    %59 = arith.mulf %54, %58 : vector<8x4x32xf32>
    %60 = vector.extract_strided_slice %59 {offsets = [0, 0, 0], sizes = [8, 1, 32], strides = [1, 1, 1]} : vector<8x4x32xf32> to vector<8x1x32xf32>
    %61 = vector.shape_cast %60 : vector<8x1x32xf32> to vector<8x32xf32>
    %62 = vector.extract_strided_slice %59 {offsets = [0, 1, 0], sizes = [8, 1, 32], strides = [1, 1, 1]} : vector<8x4x32xf32> to vector<8x1x32xf32>
    %63 = vector.shape_cast %62 : vector<8x1x32xf32> to vector<8x32xf32>
    %64 = vector.extract_strided_slice %59 {offsets = [0, 2, 0], sizes = [8, 1, 32], strides = [1, 1, 1]} : vector<8x4x32xf32> to vector<8x1x32xf32>
    %65 = vector.shape_cast %64 : vector<8x1x32xf32> to vector<8x32xf32>
    %66 = vector.extract_strided_slice %59 {offsets = [0, 3, 0], sizes = [8, 1, 32], strides = [1, 1, 1]} : vector<8x4x32xf32> to vector<8x1x32xf32>
    %67 = vector.shape_cast %66 : vector<8x1x32xf32> to vector<8x32xf32>
    %68 = tpu.concatenate %61, %63, %65, %67 in 1 : vector<8x32xf32>, vector<8x32xf32>, vector<8x32xf32>, vector<8x32xf32> -> vector<8x128xf32>
    %c0_27 = arith.constant 0 : index
    %c0_28 = arith.constant 0 : index
    %69 = vector.load %arg9[%c0_27, %c0_28] : memref<1x128xf32, #tpu.memory_space<vmem>>, vector<1x128xf32>
    %70 = vector.broadcast %69 : vector<1x128xf32> to vector<8x128xf32>
    %71 = arith.mulf %68, %70 : vector<8x128xf32>
    %c0_29 = arith.constant 0 : index
    %c0_30 = arith.constant 0 : index
    %72 = vector.load %arg10[%c0_29, %c0_30] : memref<1x128xf32, #tpu.memory_space<vmem>>, vector<1x128xf32>
    %73 = vector.broadcast %72 : vector<1x128xf32> to vector<8x128xf32>
    %74 = arith.addf %71, %73 : vector<8x128xf32>
    %c0_31 = arith.constant 0 : index
    %c0_32 = arith.constant 0 : index
    %75 = vector.load %arg11[%c0_31, %c0_32] : memref<8x128xf32, #tpu.memory_space<vmem>>, vector<8x128xf32>
    tpu.vector_store %arg11[%c0_31, %c0_32], %74 {strides = array<i32>} : memref<8x128xf32, #tpu.memory_space<vmem>>, vector<8x128xf32>,
    return
  }
  func.func @transform_0(%arg0: i32) -> (i32, i32) {
    %c0_i32 = arith.constant 0 : i32
    %c0_i32_0 = arith.constant 0 : i32
    return %arg0, %c0_i32 : i32, i32
  }
  func.func @transform_1(%arg0: i32) -> (i32, i32) {
    %c0_i32 = arith.constant 0 : i32
    %c0_i32_0 = arith.constant 0 : i32
    %c0_i32_1 = arith.constant 0 : i32
    return %c0_i32, %c0_i32_0 : i32, i32
  }
  func.func @transform_2(%arg0: i32) -> (i32, i32) {
    %c0_i32 = arith.constant 0 : i32
    %c0_i32_0 = arith.constant 0 : i32
    %c0_i32_1 = arith.constant 0 : i32
    return %c0_i32, %c0_i32_0 : i32, i32
  }
  func.func @transform_3(%arg0: i32) -> (i32, i32) {
    %c0_i32 = arith.constant 0 : i32
    %c0_i32_0 = arith.constant 0 : i32
    %c0_i32_1 = arith.constant 0 : i32
    return %c0_i32, %c0_i32_0 : i32, i32
  }
  func.func @transform_4(%arg0: i32) -> (i32, i32) {
    %c0_i32 = arith.constant 0 : i32
    %c0_i32_0 = arith.constant 0 : i32
    %c0_i32_1 = arith.constant 0 : i32
    return %c0_i32, %c0_i32_0 : i32, i32
  }
  func.func @transform_5(%arg0: i32) -> (i32, i32, i32) {
    %c0_i32 = arith.constant 0 : i32
    %c0_i32_0 = arith.constant 0 : i32
    %c0_i32_1 = arith.constant 0 : i32
    %c0_i32_2 = arith.constant 0 : i32
    return %c0_i32, %c0_i32_0, %c0_i32_1 : i32, i32, i32
  }
  func.func @transform_6(%arg0: i32) -> (i32, i32) {
    %c0_i32 = arith.constant 0 : i32
    %c0_i32_0 = arith.constant 0 : i32
    %c0_i32_1 = arith.constant 0 : i32
    return %c0_i32, %c0_i32_0 : i32, i32
  }
  func.func @transform_7(%arg0: i32) -> (i32, i32) {
    %c0_i32 = arith.constant 0 : i32
    %c0_i32_0 = arith.constant 0 : i32
    %c0_i32_1 = arith.constant 0 : i32
    return %c0_i32, %c0_i32_0 : i32, i32
  }
  func.func @transform_8(%arg0: i32) -> (i32, i32) {
    %c0_i32 = arith.constant 0 : i32
    %c0_i32_0 = arith.constant 0 : i32
    %c0_i32_1 = arith.constant 0 : i32
    return %c0_i32, %c0_i32_0 : i32, i32
  }
  func.func @transform_9(%arg0: i32) -> (i32, i32) {
    %c0_i32 = arith.constant 0 : i32
    %c0_i32_0 = arith.constant 0 : i32
    %c0_i32_1 = arith.constant 0 : i32
    return %c0_i32, %c0_i32_0 : i32, i32
  }
  func.func @transform_10(%arg0: i32) -> (i32, i32) {
    %c0_i32 = arith.constant 0 : i32
    %c0_i32_0 = arith.constant 0 : i32
    return %arg0, %c0_i32 : i32, i32
  }
}

</mosaic_0001>

<llo_original>
// kernel: tpu_custom_call.1
$region0: #{tpu_custom_call.1}
  #allocation0 [shape = 'u32[]', space=smem, size = 0x4, offset = 0x4, fixed_abs, tag = 'smem constant byte address 0x4 - core index']
  #allocation1 [shape = 'u32[144,128]{1,0:T(1,128)}', space=vmem, size = 0x12000, scoped, tag = 'internal scratch']
  %s0 = inlined_call_operand.vmem [shape: bf16[256,32], index: 0, kind: input, shape index: {}]
  %s1 = inlined_call_operand.vmem [shape: bf16[32,16], index: 1, kind: input, shape index: {}]
  %s2 = inlined_call_operand.vmem [shape: f32[1,16], index: 2, kind: input, shape index: {}]
  %s3 = inlined_call_operand.vmem [shape: bf16[32,32], index: 3, kind: input, shape index: {}]
  %s4 = inlined_call_operand.vmem [shape: f32[1,32], index: 4, kind: input, shape index: {}]
  %s5 = inlined_call_operand.vmem [shape: f32[4,1,32], index: 5, kind: input, shape index: {}]
  %s6 = inlined_call_operand.vmem [shape: bf16[32,32], index: 6, kind: input, shape index: {}]
  %s7 = inlined_call_operand.vmem [shape: f32[4,32], index: 7, kind: input, shape index: {}]
  %s8 = inlined_call_operand.vmem [shape: f32[1,128], index: 8, kind: input, shape index: {}]
  %s9 = inlined_call_operand.vmem [shape: f32[1,128], index: 9, kind: input, shape index: {}]
  %s10 = inlined_call_operand.hbm [shape: f32[32,128], index: 10, kind: output, shape index: {}]
  %s11 = sld [smem:[#allocation0]]
  $region73: #{tpu_custom_call.1} parent=0
    _
  %s13 = ssub.s32 1, %s11
  %s14 = scalar_select 0, %s13, %s11
  $region1: #{tpu_custom_call.1} parent=0
    #allocation2 [shape = 'u8[8192]{0}', space=vmem, size = 0x2000, scoped, tag = 'output window, operand 0']
    #allocation3 [shape = 's32[2]{0}', space=sflag, size = 0x8, scoped, tag = 'scoped memory for tpu_custom_call.1']
    %15 = vsyncpa [#allocation3], 0
    %s16 = scalar_lea.sflag [#allocation3], 1
    %17 = vsyncpa %s16, 0
    loop: start=0, step=1, limit=6
    $region2: #{tpu_custom_call.1} parent=1 // loop_pre_header
      _
    $region3: #{tpu_custom_call.1} parent=1 // loop_header
      %s19 = sphi 0, %s23
      %p20 = scmp.ge.s32.totalorder %s19, 6
      %s29 = sphi 0, %s31
      %s32 = sphi 0, %s29
      %s33 = sphi 0, %s32
      %s49 = sphi 0, %s33
      %s53 = sphi 0, %s53
      %s55 = sphi 0, %s53
      %s56 = sphi 0, %s55
      %s70 = sphi 0, %s56
      %s74 = sphi 0, %s74
      %s76 = sphi 0, %s74
      %s77 = sphi 0, %s76
      %s91 = sphi 0, %s77
      %s95 = sphi 0, %s95
      %s97 = sphi 0, %s95
      %s98 = sphi 0, %s97
      %s112 = sphi 0, %s98
      %s116 = sphi 0, %s116
      %s118 = sphi 0, %s116
      %s119 = sphi 0, %s118
      %s133 = sphi 0, %s119
      %s137 = sphi 0, %s137
      %s139 = sphi 0, %s137
      %s140 = sphi 0, %s139
      %s154 = sphi 0, %s140
      %s158 = sphi 0, %s158
      %s160 = sphi 0, %s158
      %s161 = sphi 0, %s160
      %s175 = sphi 0, %s161
      %s179 = sphi 0, %s179
      %s181 = sphi 0, %s179
      %s182 = sphi 0, %s181
      %s196 = sphi 0, %s182
      %s200 = sphi 0, %s200
      %s202 = sphi 0, %s200
      %s203 = sphi 0, %s202
      %s217 = sphi 0, %s203
      %s221 = sphi 0, %s221
      %s223 = sphi 0, %s221
      %s224 = sphi 0, %s223
      %s238 = sphi 0, %s224
      %s244 = sphi 0, %s246
      %s247 = sphi 0, %s244
      %s248 = sphi 0, %s247
      %s264 = sphi 0, %s248
    $region4: #{tpu_custom_call.1} parent=1 // loop_header_branch
      %22 = sbr.rel (%p20) target = $region8
    $region5: #{tpu_custom_call.1} parent=1 // loop_body
      %s24 = ssub.s32 %s19, 1
      %s25 = ssub.s32 %s19, 2
      %s26 = sadd.s32 %s19, 1
      %s27 = ssub.s32 %s19, %s26
      %p28 = scmp.eq.s32.totalorder %s27, 0
      %s30 = sadd.s32 %s29, 1
      %s31 = scalar_select %p28, %s29, %s30
      %p34 = pneg %p28
      %p35 = scmp.eq.s32.totalorder %s19, 3
      %p36 = por %p34, %p35
      %p37 = scmp.ne.s32.totalorder %s29, %s32
      %p38 = scmp.eq.s32.totalorder %s19, 0
      %p39 = por %p37, %p38
      %p40 = scmp.ne.s32.totalorder %s29, %s32
      %p41 = scmp.eq.s32.totalorder %s24, 3
      %p42 = por %p40, %p41
      %p43 = scmp.ne.s32.totalorder %s32, %s33
      %p44 = scmp.eq.s32.totalorder %s24, 0
      %p45 = por %p43, %p44
      %p46 = scmp.ne.s32.totalorder %s32, %s33
      %p47 = scmp.eq.s32.totalorder %s25, 3
      %p48 = por %p46, %p47
      %p50 = scmp.ne.s32.totalorder %s33, %s49
      %p51 = scmp.eq.s32.totalorder %s25, 0
      %p52 = por %p50, %p51
      %s54 = sadd.s32 %s53, 1
      %p57 = scmp.eq.s32.totalorder %s19, 3
      %p58 = scmp.ne.s32.totalorder %s53, %s55
      %p59 = scmp.eq.s32.totalorder %s19, 0
      %p60 = por %p58, %p59
      %p61 = scmp.ne.s32.totalorder %s53, %s55
      %p62 = scmp.eq.s32.totalorder %s24, 3
      %p63 = por %p61, %p62
      %p64 = scmp.ne.s32.totalorder %s55, %s56
      %p65 = scmp.eq.s32.totalorder %s24, 0
      %p66 = por %p64, %p65
      %p67 = scmp.ne.s32.totalorder %s55, %s56
      %p68 = scmp.eq.s32.totalorder %s25, 3
      %p69 = por %p67, %p68
      %p71 = scmp.ne.s32.totalorder %s56, %s70
      %p72 = scmp.eq.s32.totalorder %s25, 0
      %p73 = por %p71, %p72
      %s75 = sadd.s32 %s74, 1
      %p78 = scmp.eq.s32.totalorder %s19, 3
      %p79 = scmp.ne.s32.totalorder %s74, %s76
      %p80 = scmp.eq.s32.totalorder %s19, 0
      %p81 = por %p79, %p80
      %p82 = scmp.ne.s32.totalorder %s74, %s76
      %p83 = scmp.eq.s32.totalorder %s24, 3
      %p84 = por %p82, %p83
      %p85 = scmp.ne.s32.totalorder %s76, %s77
      %p86 = scmp.eq.s32.totalorder %s24, 0
      %p87 = por %p85, %p86
      %p88 = scmp.ne.s32.totalorder %s76, %s77
      %p89 = scmp.eq.s32.totalorder %s25, 3
      %p90 = por %p88, %p89
      %p92 = scmp.ne.s32.totalorder %s77, %s91
      %p93 = scmp.eq.s32.totalorder %s25, 0
      %p94 = por %p92, %p93
      %s96 = sadd.s32 %s95, 1
      %p99 = scmp.eq.s32.totalorder %s19, 3
      %p100 = scmp.ne.s32.totalorder %s95, %s97
      %p101 = scmp.eq.s32.totalorder %s19, 0
      %p102 = por %p100, %p101
      %p103 = scmp.ne.s32.totalorder %s95, %s97
      %p104 = scmp.eq.s32.totalorder %s24, 3
      %p105 = por %p103, %p104
      %p106 = scmp.ne.s32.totalorder %s97, %s98
      %p107 = scmp.eq.s32.totalorder %s24, 0
      %p108 = por %p106, %p107
      %p109 = scmp.ne.s32.totalorder %s97, %s98
      %p110 = scmp.eq.s32.totalorder %s25, 3
      %p111 = por %p109, %p110
      %p113 = scmp.ne.s32.totalorder %s98, %s112
      %p114 = scmp.eq.s32.totalorder %s25, 0
      %p115 = por %p113, %p114
      %s117 = sadd.s32 %s116, 1
      %p120 = scmp.eq.s32.totalorder %s19, 3
      %p121 = scmp.ne.s32.totalorder %s116, %s118
      %p122 = scmp.eq.s32.totalorder %s19, 0
      %p123 = por %p121, %p122
      %p124 = scmp.ne.s32.totalorder %s116, %s118
      %p125 = scmp.eq.s32.totalorder %s24, 3
      %p126 = por %p124, %p125
      %p127 = scmp.ne.s32.totalorder %s118, %s119
      %p128 = scmp.eq.s32.totalorder %s24, 0
      %p129 = por %p127, %p128
      %p130 = scmp.ne.s32.totalorder %s118, %s119
      %p131 = scmp.eq.s32.totalorder %s25, 3
      %p132 = por %p130, %p131
      %p134 = scmp.ne.s32.totalorder %s119, %s133
      %p135 = scmp.eq.s32.totalorder %s25, 0
      %p136 = por %p134, %p135
      %s138 = sadd.s32 %s137, 1
      %p141 = scmp.eq.s32.totalorder %s19, 3
      %p142 = scmp.ne.s32.totalorder %s137, %s139
      %p143 = scmp.eq.s32.totalorder %s19, 0
      %p144 = por %p142, %p143
      %p145 = scmp.ne.s32.totalorder %s137, %s139
      %p146 = scmp.eq.s32.totalorder %s24, 3
      %p147 = por %p145, %p146
      %p148 = scmp.ne.s32.totalorder %s139, %s140
      %p149 = scmp.eq.s32.totalorder %s24, 0
      %p150 = por %p148, %p149
      %p151 = scmp.ne.s32.totalorder %s139, %s140
      %p152 = scmp.eq.s32.totalorder %s25, 3
      %p153 = por %p151, %p152
      %p155 = scmp.ne.s32.totalorder %s140, %s154
      %p156 = scmp.eq.s32.totalorder %s25, 0
      %p157 = por %p155, %p156
      %s159 = sadd.s32 %s158, 1
      %p162 = scmp.eq.s32.totalorder %s19, 3
      %p163 = scmp.ne.s32.totalorder %s158, %s160
      %p164 = scmp.eq.s32.totalorder %s19, 0
      %p165 = por %p163, %p164
      %p166 = scmp.ne.s32.totalorder %s158, %s160
      %p167 = scmp.eq.s32.totalorder %s24, 3
      %p168 = por %p166, %p167
      %p169 = scmp.ne.s32.totalorder %s160, %s161
      %p170 = scmp.eq.s32.totalorder %s24, 0
      %p171 = por %p169, %p170
      %p172 = scmp.ne.s32.totalorder %s160, %s161
      %p173 = scmp.eq.s32.totalorder %s25, 3
      %p174 = por %p172, %p173
      %p176 = scmp.ne.s32.totalorder %s161, %s175
      %p177 = scmp.eq.s32.totalorder %s25, 0
      %p178 = por %p176, %p177
      %s180 = sadd.s32 %s179, 1
      %p183 = scmp.eq.s32.totalorder %s19, 3
      %p184 = scmp.ne.s32.totalorder %s179, %s181
      %p185 = scmp.eq.s32.totalorder %s19, 0
      %p186 = por %p184, %p185
      %p187 = scmp.ne.s32.totalorder %s179, %s181
      %p188 = scmp.eq.s32.totalorder %s24, 3
      %p189 = por %p187, %p188
      %p190 = scmp.ne.s32.totalorder %s181, %s182
      %p191 = scmp.eq.s32.totalorder %s24, 0
      %p192 = por %p190, %p191
      %p193 = scmp.ne.s32.totalorder %s181, %s182
      %p194 = scmp.eq.s32.totalorder %s25, 3
      %p195 = por %p193, %p194
      %p197 = scmp.ne.s32.totalorder %s182, %s196
      %p198 = scmp.eq.s32.totalorder %s25, 0
      %p199 = por %p197, %p198
      %s201 = sadd.s32 %s200, 1
      %p204 = scmp.eq.s32.totalorder %s19, 3
      %p205 = scmp.ne.s32.totalorder %s200, %s202
      %p206 = scmp.eq.s32.totalorder %s19, 0
      %p207 = por %p205, %p206
      %p208 = scmp.ne.s32.totalorder %s200, %s202
      %p209 = scmp.eq.s32.totalorder %s24, 3
      %p210 = por %p208, %p209
      %p211 = scmp.ne.s32.totalorder %s202, %s203
      %p212 = scmp.eq.s32.totalorder %s24, 0
      %p213 = por %p211, %p212
      %p214 = scmp.ne.s32.totalorder %s202, %s203
      %p215 = scmp.eq.s32.totalorder %s25, 3
      %p216 = por %p214, %p215
      %p218 = scmp.ne.s32.totalorder %s203, %s217
      %p219 = scmp.eq.s32.totalorder %s25, 0
      %p220 = por %p218, %p219
      %s222 = sadd.s32 %s221, 1
      %p225 = scmp.eq.s32.totalorder %s19, 3
      %p226 = scmp.ne.s32.totalorder %s221, %s223
      %p227 = scmp.eq.s32.totalorder %s19, 0
      %p228 = por %p226, %p227
      %p229 = scmp.ne.s32.totalorder %s221, %s223
      %p230 = scmp.eq.s32.totalorder %s24, 3
      %p231 = por %p229, %p230
      %p232 = scmp.ne.s32.totalorder %s223, %s224
      %p233 = scmp.eq.s32.totalorder %s24, 0
      %p234 = por %p232, %p233
      %p235 = scmp.ne.s32.totalorder %s223, %s224
      %p236 = scmp.eq.s32.totalorder %s25, 3
      %p237 = por %p235, %p236
      %p239 = scmp.ne.s32.totalorder %s224, %s238
      %p240 = scmp.eq.s32.totalorder %s25, 0
      %p241 = por %p239, %p240
      %s242 = ssub.s32 %s19, %s26
      %p243 = scmp.eq.s32.totalorder %s242, 0
      %s245 = sadd.s32 %s244, 1
      %s246 = scalar_select %p243, %s244, %s245
      %p249 = pneg %p243
      %p250 = scmp.eq.s32.totalorder %s19, 3
      %p251 = por %p249, %p250
      %p252 = scmp.ne.s32.totalorder %s244, %s247
      %p253 = scmp.eq.s32.totalorder %s19, 0
      %p254 = por %p252, %p253
      %p255 = scmp.ne.s32.totalorder %s244, %s247
      %p256 = scmp.eq.s32.totalorder %s24, 3
      %p257 = por %p255, %p256
      %p258 = scmp.ne.s32.totalorder %s247, %s248
      %p259 = scmp.eq.s32.totalorder %s24, 0
      %p260 = por %p258, %p259
      %p261 = scmp.ne.s32.totalorder %s247, %s248
      %p262 = scmp.eq.s32.totalorder %s25, 3
      %p263 = por %p261, %p262
      %p265 = scmp.ne.s32.totalorder %s248, %s264
      %p266 = scmp.eq.s32.totalorder %s25, 0
      %p267 = por %p265, %p266
      %p268 = scmp.le.s32.totalorder 1, %s19
      %p269 = scmp.lt.s32.totalorder %s19, 5
      %p270 = pnand %p268, %p269
      %p271 = pneg %p270
      // Predicated region
      $region9: #{tpu_custom_call.1} parent=5 // pred_check
        _
      $region10: #{tpu_custom_call.1} parent=5 // pred_check_branch
        %273 = sbr.rel (%p270) target = $region12
      $region11: #{tpu_custom_call.1} parent=5 // pred_region
        %s274 = ssub.s32 %s19, 1
        // Predicated region
        $region13: #{tpu_custom_call.1} parent=11 // pred_check
          %p275 = pneg %p66
        $region14: #{tpu_custom_call.1} parent=11 // pred_check_branch
          %277 = sbr.rel (%p275) target = $region16
        $region15: #{tpu_custom_call.1} parent=11 // pred_region
          _
        $region16: #{tpu_custom_call.1} parent=11 // pred_fallthru
          _
        // Predicated region
        $region17: #{tpu_custom_call.1} parent=11 // pred_check
          %p278 = pneg %p87
        $region18: #{tpu_custom_call.1} parent=11 // pred_check_branch
          %280 = sbr.rel (%p278) target = $region20
        $region19: #{tpu_custom_call.1} parent=11 // pred_region
          _
        $region20: #{tpu_custom_call.1} parent=11 // pred_fallthru
          _
        // Predicated region
        $region21: #{tpu_custom_call.1} parent=11 // pred_check
          %p281 = pneg %p108
        $region22: #{tpu_custom_call.1} parent=11 // pred_check_branch
          %283 = sbr.rel (%p281) target = $region24
        $region23: #{tpu_custom_call.1} parent=11 // pred_region
          _
        $region24: #{tpu_custom_call.1} parent=11 // pred_fallthru
          _
        // Predicated region
        $region25: #{tpu_custom_call.1} parent=11 // pred_check
          %p284 = pneg %p129
        $region26: #{tpu_custom_call.1} parent=11 // pred_check_branch
          %286 = sbr.rel (%p284) target = $region28
        $region27: #{tpu_custom_call.1} parent=11 // pred_region
          _
        $region28: #{tpu_custom_call.1} parent=11 // pred_fallthru
          _
        // Predicated region
        $region29: #{tpu_custom_call.1} parent=11 // pred_check
          %p287 = pneg %p150
        $region30: #{tpu_custom_call.1} parent=11 // pred_check_branch
          %289 = sbr.rel (%p287) target = $region32
        $region31: #{tpu_custom_call.1} parent=11 // pred_region
          _
        $region32: #{tpu_custom_call.1} parent=11 // pred_fallthru
          _
        // Predicated region
        $region33: #{tpu_custom_call.1} parent=11 // pred_check
          %p290 = pneg %p171
        $region34: #{tpu_custom_call.1} parent=11 // pred_check_branch
          %292 = sbr.rel (%p290) target = $region36
        $region35: #{tpu_custom_call.1} parent=11 // pred_region
          _
        $region36: #{tpu_custom_call.1} parent=11 // pred_fallthru
          _
        // Predicated region
        $region37: #{tpu_custom_call.1} parent=11 // pred_check
          %p293 = pneg %p192
        $region38: #{tpu_custom_call.1} parent=11 // pred_check_branch
          %295 = sbr.rel (%p293) target = $region40
        $region39: #{tpu_custom_call.1} parent=11 // pred_region
          _
        $region40: #{tpu_custom_call.1} parent=11 // pred_fallthru
          _
        // Predicated region
        $region41: #{tpu_custom_call.1} parent=11 // pred_check
          %p296 = pneg %p213
        $region42: #{tpu_custom_call.1} parent=11 // pred_check_branch
          %298 = sbr.rel (%p296) target = $region44
        $region43: #{tpu_custom_call.1} parent=11 // pred_region
          _
        $region44: #{tpu_custom_call.1} parent=11 // pred_fallthru
          _
        // Predicated region
        $region45: #{tpu_custom_call.1} parent=11 // pred_check
          %p299 = pneg %p234
        $region46: #{tpu_custom_call.1} parent=11 // pred_check_branch
          %301 = sbr.rel (%p299) target = $region48
        $region47: #{tpu_custom_call.1} parent=11 // pred_region
          _
        $region48: #{tpu_custom_call.1} parent=11 // pred_fallthru
          _
      $region12: #{tpu_custom_call.1} parent=5 // pred_fallthru
        _
      %p302 = scmp.lt.s32.totalorder %s19, 4
      // Predicated region
      $region49: #{tpu_custom_call.1} parent=5 // pred_check
        %p303 = pneg %p302
      $region50: #{tpu_custom_call.1} parent=5 // pred_check_branch
        %305 = sbr.rel (%p303) target = $region52
      $region51: #{tpu_custom_call.1} parent=5 // pred_region
        // Predicated region
        $region53: #{tpu_custom_call.1} parent=51 // pred_check
          %p306 = pneg %p39
        $region54: #{tpu_custom_call.1} parent=51 // pred_check_branch
          %308 = sbr.rel (%p306) target = $region56
        $region55: #{tpu_custom_call.1} parent=51 // pred_region
          %s309 = smul.u32 8, %s19
          %p310 = scmp.lt.s32.totalorder %s309, 31
          %s311 = scalar_select %p310, %s309, 31
          %s312 = smul.addr %s311, 4
          %s313 = scalar_lea.vmem %s0, %s312
          %s314 = smul.u32 8, %s19
        $region56: #{tpu_custom_call.1} parent=51 // pred_fallthru
          _
      $region52: #{tpu_custom_call.1} parent=5 // pred_fallthru
        _
      %p315 = scmp.le.s32.totalorder 1, %s19
      %p316 = scmp.lt.s32.totalorder %s19, 5
      %p317 = pnand %p315, %p316
      %p318 = pneg %p317
      // Predicated region
      $region57: #{tpu_custom_call.1} parent=5 // pred_check
        _
      $region58: #{tpu_custom_call.1} parent=5 // pred_check_branch
        %320 = sbr.rel (%p317) target = $region60
      $region59: #{tpu_custom_call.1} parent=5 // pred_region
        %s321 = ssub.s32 %s19, 1
        %s322 = smul.u32 8, %s24
        %p323 = scmp.lt.s32.totalorder %s322, 31
        %s324 = scalar_select %p323, %s322, 31
        %s325 = smul.addr %s324, 4
        %s326 = scalar_lea.vmem %s0, %s325
        %p327 = pneg %p45
        %p328 = pneg %p42
        %p329 = pneg %p66
        %p330 = pneg %p63
        %p331 = pneg %p87
        %p332 = pneg %p84
        %p333 = pneg %p108
        %p334 = pneg %p105
        %p335 = pneg %p129
        %p336 = pneg %p126
        %p337 = pneg %p150
        %p338 = pneg %p147
        %p339 = pneg %p171
        %p340 = pneg %p168
        %p341 = pneg %p192
        %p342 = pneg %p189
        %p343 = pneg %p213
        %p344 = pneg %p210
        %p345 = pneg %p234
        %p346 = pneg %p231
        %p347 = pneg %p260
        %p348 = pneg %p257
        %s349 = sand.u32 %s247, 1
        %s350 = scalar_lea.sflag [#allocation3], %s349
        %s351 = sand.u32 %s247, 1
        %s352 = smul.addr %s351, 8
        %s353 = scalar_lea.vmem [#allocation2], %s352
        %s354 = smul.u32 8, %s24
        %p355 = scmp.lt.s32.totalorder %s354, 31
        %s356 = scalar_select %p355, %s354, 31
        %s357 = smul.addr %s356, 4
        %s358 = scalar_lea.vmem %s0, %s357
        %s359 = smul.u32 8, %s24
        %v361 = vld [vmem:[%s358] sm:$0xf]
        %v362 = vld [vmem:[%s358 + $0x4] sm:$0xf]
        %v363 = vld [vmem:[%s358 + $0x8] sm:$0xf]
        %v364 = vld [vmem:[%s358 + $0xc] sm:$0xf]
        %v365 = vld [vmem:[%s358 + $0x10] sm:$0xf]
        %v366 = vld [vmem:[%s358 + $0x14] sm:$0xf]
        %v367 = vld [vmem:[%s358 + $0x18] sm:$0xf]
        %v368 = vld [vmem:[%s358 + $0x1c] sm:$0xf]
        %v369 = vld [vmem:[%s1] sm:$0xf]
        %v370 = vld [vmem:[%s1 + $0x4] sm:$0xf]
        %v371 = vld [vmem:[%s1 + $0x8] sm:$0xf]
        %v372 = vld [vmem:[%s1 + $0xc] sm:$0xf]
        %v373 = vld [vmem:[%s2] sm:$0x1]
        %v375 = vlaneseq
        %v376 = vshrl.u32 %v375, 7
        %v377 = vsub.s32 0, %v376
        %v378 = vrot.slane %v373, %v377
        %v388 = vunpack.c.l.b16 %v361
        %v389 = vunpack.c.l.b16 %v362
        %v390 = vunpack.c.l.b16 %v363
        %v391 = vunpack.c.l.b16 %v364
        %v392 = vunpack.c.l.b16 %v365
        %v393 = vunpack.c.l.b16 %v366
        %v394 = vunpack.c.l.b16 %v367
        %v395 = vunpack.c.l.b16 %v368
        %v396 = vpack.c.b16 %v389, %v388
        %v397 = vpack.c.b16 %v391, %v390
        %v398 = vpack.c.b16 %v393, %v392
        %v399 = vpack.c.b16 %v395, %v394
        %v404 = vunpack.c.l.b16 %v369
        %v405 = vunpack.c.l.b16 %v370
        %v406 = vunpack.c.l.b16 %v371
        %v407 = vunpack.c.l.b16 %v372
        %v408 = vpack.c.b16 %v405, %v404
        %v409 = vpack.c.b16 %v407, %v406
        %vm412 = vcmask 261120
        %v414 = vsel %vm412, %v396, 0
        %v417 = vsel %vm412, %v397, 0
        %v420 = vsel %vm412, %v398, 0
        %v423 = vsel %vm412, %v399, 0
        %425 = vmatprep.subr.bf16.mxu0 0
        %426 = vmatpush1.bf16.msra.mxu0 %v408
        %427 = vmatprep.subr.bf16.mxu0 0
        %428 = vmatpush1.bf16.msra.mxu0 %v409
        %429 = vmatprep.subr.bf16.mxu0 0
        %430 = vmatpush1.bf16.msra.mxu0 0
        %431 = vmatprep.subr.bf16.mxu0 0
        %432 = vmatpush1.bf16.msra.mxu0 0
        %433 = vmatprep.subr.bf16.mxu0 0
        %434 = vmatpush1.bf16.msra.mxu0 0
        %435 = vmatprep.subr.bf16.mxu0 0
        %436 = vmatpush1.bf16.msra.mxu0 0
        %437 = vmatprep.subr.bf16.mxu0 0
        %438 = vmatpush1.bf16.msra.mxu0 0
        %439 = vmatprep.subr.bf16.mxu0 0
        %440 = vmatpush1.bf16.msra.mxu0 0
        %441 = vmatprep.subr.bf16.mxu0 0
        %442 = vmatpush1.bf16.msra.mxu0 0
        %443 = vmatprep.subr.bf16.mxu0 0
        %444 = vmatpush1.bf16.msra.mxu0 0
        %445 = vmatprep.subr.bf16.mxu0 0
        %446 = vmatpush1.bf16.msra.mxu0 0
        %447 = vmatprep.subr.bf16.mxu0 0
        %448 = vmatpush1.bf16.msra.mxu0 0
        %449 = vmatprep.subr.bf16.mxu0 0
        %450 = vmatpush1.bf16.msra.mxu0 0
        %451 = vmatprep.subr.bf16.mxu0 0
        %452 = vmatpush1.bf16.msra.mxu0 0
        %453 = vmatprep.subr.bf16.mxu0 0
        %454 = vmatpush1.bf16.msra.mxu0 0
        %455 = vmatprep.subr.bf16.mxu0 0
        %456 = vmatpush1.bf16.msra.mxu0 0
        %457 = vmatprep.mubr.bf16.mxu0 0
        %458 = vmatmul.mubr.bf16.gmra.mrb[0].mxu0 %v414
        %v459 = vpop.f32.mrb[0].mxu0
        %v460 = vadd.f32 %v378, %v459
        %v461 = vpop.f32.mrb[0].mxu0
        %v462 = vpop.f32.mrb[0].mxu0
        %v463 = vadd.f32 %v378, %v462
        %v464 = vpop.f32.mrb[0].mxu0
        %465 = vmatprep.mubr.bf16.mxu0 0
        %466 = vmatmul.mubr.bf16.gmra.mrb[0].mxu0 %v417
        %v467 = vpop.f32.mrb[0].mxu0
        %v468 = vadd.f32 %v378, %v467
        %v469 = vpop.f32.mrb[0].mxu0
        %v470 = vpop.f32.mrb[0].mxu0
        %v471 = vadd.f32 %v378, %v470
        %v472 = vpop.f32.mrb[0].mxu0
        %473 = vmatprep.mubr.bf16.mxu0 0
        %474 = vmatmul.mubr.bf16.gmra.mrb[0].mxu0 %v420
        %v475 = vpop.f32.mrb[0].mxu0
        %v476 = vadd.f32 %v378, %v475
        %v477 = vpop.f32.mrb[0].mxu0
        %v478 = vpop.f32.mrb[0].mxu0
        %v479 = vadd.f32 %v378, %v478
        %v480 = vpop.f32.mrb[0].mxu0
        %481 = vmatprep.mubr.bf16.mxu0 0
        %482 = vmatmul.mubr.bf16.gmra.mrb[0].mxu0 %v423
        %v483 = vpop.f32.mrb[0].mxu0
        %v484 = vadd.f32 %v378, %v483
        %v485 = vpop.f32.mrb[0].mxu0
        %v486 = vpop.f32.mrb[0].mxu0
        %v487 = vadd.f32 %v378, %v486
        %v488 = vpop.f32.mrb[0].mxu0
        %489 = vdwg.mxu0
        %490 = vxpose.xlu0.b32.start [1/16] %v460, 128
        %491 = vxpose.xlu0.b32.cont [2/16] 0.0, 128
        %492 = vxpose.xlu0.b32.cont [3/16] 0.0, 128
        %493 = vxpose.xlu0.b32.cont [4/16] 0.0, 128
        %494 = vxpose.xlu0.b32.cont [5/16] 0.0, 128
        %495 = vxpose.xlu0.b32.cont [6/16] 0.0, 128
        %496 = vxpose.xlu0.b32.cont [7/16] 0.0, 128
        %497 = vxpose.xlu0.b32.cont [8/16] 0.0, 128
        %498 = vxpose.xlu0.b32.cont [9/16] 0.0, 128
        %499 = vxpose.xlu0.b32.cont [10/16] 0.0, 128
        %500 = vxpose.xlu0.b32.cont [11/16] 0.0, 128
        %501 = vxpose.xlu0.b32.cont [12/16] 0.0, 128
        %502 = vxpose.xlu0.b32.cont [13/16] 0.0, 128
        %503 = vxpose.xlu0.b32.cont [14/16] 0.0, 128
        %504 = vxpose.xlu0.b32.cont [15/16] 0.0, 128
        %505 = vxpose.xlu0.b32.end [16/16] 0.0, 128
        %v506 = vpop.trf.xlu0
        %v507 = vpop.trf.xlu0
        %v508 = vpop.trf.xlu0
        %v509 = vpop.trf.xlu0
        %v510 = vpop.trf.xlu0
        %v511 = vpop.trf.xlu0
        %v512 = vpop.trf.xlu0
        %v513 = vpop.trf.xlu0
        %v514 = vpop.trf.xlu0
        %v515 = vpop.trf.xlu0
        %v516 = vpop.trf.xlu0
        %v517 = vpop.trf.xlu0
        %v518 = vpop.trf.xlu0
        %v519 = vpop.trf.xlu0
        %v520 = vpop.trf.xlu0
        %v521 = vpop.trf.xlu0
        %522 = vxpose.xlu0.b32.start [1/16] %v463, 128
        %523 = vxpose.xlu0.b32.cont [2/16] 0.0, 128
        %524 = vxpose.xlu0.b32.cont [3/16] 0.0, 128
        %525 = vxpose.xlu0.b32.cont [4/16] 0.0, 128
        %526 = vxpose.xlu0.b32.cont [5/16] 0.0, 128
        %527 = vxpose.xlu0.b32.cont [6/16] 0.0, 128
        %528 = vxpose.xlu0.b32.cont [7/16] 0.0, 128
        %529 = vxpose.xlu0.b32.cont [8/16] 0.0, 128
        %530 = vxpose.xlu0.b32.cont [9/16] 0.0, 128
        %531 = vxpose.xlu0.b32.cont [10/16] 0.0, 128
        %532 = vxpose.xlu0.b32.cont [11/16] 0.0, 128
        %533 = vxpose.xlu0.b32.cont [12/16] 0.0, 128
        %534 = vxpose.xlu0.b32.cont [13/16] 0.0, 128
        %535 = vxpose.xlu0.b32.cont [14/16] 0.0, 128
        %536 = vxpose.xlu0.b32.cont [15/16] 0.0, 128
        %537 = vxpose.xlu0.b32.end [16/16] 0.0, 128
        %v538 = vpop.trf.xlu0
        %v539 = vpop.trf.xlu0
        %v540 = vpop.trf.xlu0
        %v541 = vpop.trf.xlu0
        %v542 = vpop.trf.xlu0
        %v543 = vpop.trf.xlu0
        %v544 = vpop.trf.xlu0
        %v545 = vpop.trf.xlu0
        %v546 = vpop.trf.xlu0
        %v547 = vpop.trf.xlu0
        %v548 = vpop.trf.xlu0
        %v549 = vpop.trf.xlu0
        %v550 = vpop.trf.xlu0
        %v551 = vpop.trf.xlu0
        %v552 = vpop.trf.xlu0
        %v553 = vpop.trf.xlu0
        %554 = vxpose.xlu0.b32.start [1/16] %v468, 128
        %555 = vxpose.xlu0.b32.cont [2/16] 0.0, 128
        %556 = vxpose.xlu0.b32.cont [3/16] 0.0, 128
        %557 = vxpose.xlu0.b32.cont [4/16] 0.0, 128
        %558 = vxpose.xlu0.b32.cont [5/16] 0.0, 128
        %559 = vxpose.xlu0.b32.cont [6/16] 0.0, 128
        %560 = vxpose.xlu0.b32.cont [7/16] 0.0, 128
        %561 = vxpose.xlu0.b32.cont [8/16] 0.0, 128
        %562 = vxpose.xlu0.b32.cont [9/16] 0.0, 128
        %563 = vxpose.xlu0.b32.cont [10/16] 0.0, 128
        %564 = vxpose.xlu0.b32.cont [11/16] 0.0, 128
        %565 = vxpose.xlu0.b32.cont [12/16] 0.0, 128
        %566 = vxpose.xlu0.b32.cont [13/16] 0.0, 128
        %567 = vxpose.xlu0.b32.cont [14/16] 0.0, 128
        %568 = vxpose.xlu0.b32.cont [15/16] 0.0, 128
        %569 = vxpose.xlu0.b32.end [16/16] 0.0, 128
        %v570 = vpop.trf.xlu0
        %v571 = vpop.trf.xlu0
        %v572 = vpop.trf.xlu0
        %v573 = vpop.trf.xlu0
        %v574 = vpop.trf.xlu0
        %v575 = vpop.trf.xlu0
        %v576 = vpop.trf.xlu0
        %v577 = vpop.trf.xlu0
        %v578 = vpop.trf.xlu0
        %v579 = vpop.trf.xlu0
        %v580 = vpop.trf.xlu0
        %v581 = vpop.trf.xlu0
        %v582 = vpop.trf.xlu0
        %v583 = vpop.trf.xlu0
        %v584 = vpop.trf.xlu0
        %v585 = vpop.trf.xlu0
        %586 = vxpose.xlu0.b32.start [1/16] %v471, 128
        %587 = vxpose.xlu0.b32.cont [2/16] 0.0, 128
        %588 = vxpose.xlu0.b32.cont [3/16] 0.0, 128
        %589 = vxpose.xlu0.b32.cont [4/16] 0.0, 128
        %590 = vxpose.xlu0.b32.cont [5/16] 0.0, 128
        %591 = vxpose.xlu0.b32.cont [6/16] 0.0, 128
        %592 = vxpose.xlu0.b32.cont [7/16] 0.0, 128
        %593 = vxpose.xlu0.b32.cont [8/16] 0.0, 128
        %594 = vxpose.xlu0.b32.cont [9/16] 0.0, 128
        %595 = vxpose.xlu0.b32.cont [10/16] 0.0, 128
        %596 = vxpose.xlu0.b32.cont [11/16] 0.0, 128
        %597 = vxpose.xlu0.b32.cont [12/16] 0.0, 128
        %598 = vxpose.xlu0.b32.cont [13/16] 0.0, 128
        %599 = vxpose.xlu0.b32.cont [14/16] 0.0, 128
        %600 = vxpose.xlu0.b32.cont [15/16] 0.0, 128
        %601 = vxpose.xlu0.b32.end [16/16] 0.0, 128
        %v602 = vpop.trf.xlu0
        %v603 = vpop.trf.xlu0
        %v604 = vpop.trf.xlu0
        %v605 = vpop.trf.xlu0
        %v606 = vpop.trf.xlu0
        %v607 = vpop.trf.xlu0
        %v608 = vpop.trf.xlu0
        %v609 = vpop.trf.xlu0
        %v610 = vpop.trf.xlu0
        %v611 = vpop.trf.xlu0
        %v612 = vpop.trf.xlu0
        %v613 = vpop.trf.xlu0
        %v614 = vpop.trf.xlu0
        %v615 = vpop.trf.xlu0
        %v616 = vpop.trf.xlu0
        %v617 = vpop.trf.xlu0
        %618 = vxpose.xlu0.b32.start [1/16] %v476, 128
        %619 = vxpose.xlu0.b32.cont [2/16] 0.0, 128
        %620 = vxpose.xlu0.b32.cont [3/16] 0.0, 128
        %621 = vxpose.xlu0.b32.cont [4/16] 0.0, 128
        %622 = vxpose.xlu0.b32.cont [5/16] 0.0, 128
        %623 = vxpose.xlu0.b32.cont [6/16] 0.0, 128
        %624 = vxpose.xlu0.b32.cont [7/16] 0.0, 128
        %625 = vxpose.xlu0.b32.cont [8/16] 0.0, 128
        %626 = vxpose.xlu0.b32.cont [9/16] 0.0, 128
        %627 = vxpose.xlu0.b32.cont [10/16] 0.0, 128
        %628 = vxpose.xlu0.b32.cont [11/16] 0.0, 128
        %629 = vxpose.xlu0.b32.cont [12/16] 0.0, 128
        %630 = vxpose.xlu0.b32.cont [13/16] 0.0, 128
        %631 = vxpose.xlu0.b32.cont [14/16] 0.0, 128
        %632 = vxpose.xlu0.b32.cont [15/16] 0.0, 128
        %633 = vxpose.xlu0.b32.end [16/16] 0.0, 128
        %v634 = vpop.trf.xlu0
        %v635 = vpop.trf.xlu0
        %v636 = vpop.trf.xlu0
        %v637 = vpop.trf.xlu0
        %v638 = vpop.trf.xlu0
        %v639 = vpop.trf.xlu0
        %v640 = vpop.trf.xlu0
        %v641 = vpop.trf.xlu0
        %v642 = vpop.trf.xlu0
        %v643 = vpop.trf.xlu0
        %v644 = vpop.trf.xlu0
        %v645 = vpop.trf.xlu0
        %v646 = vpop.trf.xlu0
        %v647 = vpop.trf.xlu0
        %v648 = vpop.trf.xlu0
        %v649 = vpop.trf.xlu0
        %650 = vxpose.xlu0.b32.start [1/16] %v479, 128
        %651 = vxpose.xlu0.b32.cont [2/16] 0.0, 128
        %652 = vxpose.xlu0.b32.cont [3/16] 0.0, 128
        %653 = vxpose.xlu0.b32.cont [4/16] 0.0, 128
        %654 = vxpose.xlu0.b32.cont [5/16] 0.0, 128
        %655 = vxpose.xlu0.b32.cont [6/16] 0.0, 128
        %656 = vxpose.xlu0.b32.cont [7/16] 0.0, 128
        %657 = vxpose.xlu0.b32.cont [8/16] 0.0, 128
        %658 = vxpose.xlu0.b32.cont [9/16] 0.0, 128
        %659 = vxpose.xlu0.b32.cont [10/16] 0.0, 128
        %660 = vxpose.xlu0.b32.cont [11/16] 0.0, 128
        %661 = vxpose.xlu0.b32.cont [12/16] 0.0, 128
        %662 = vxpose.xlu0.b32.cont [13/16] 0.0, 128
        %663 = vxpose.xlu0.b32.cont [14/16] 0.0, 128
        %664 = vxpose.xlu0.b32.cont [15/16] 0.0, 128
        %665 = vxpose.xlu0.b32.end [16/16] 0.0, 128
        %v666 = vpop.trf.xlu0
        %v667 = vpop.trf.xlu0
        %v668 = vpop.trf.xlu0
        %v669 = vpop.trf.xlu0
        %v670 = vpop.trf.xlu0
        %v671 = vpop.trf.xlu0
        %v672 = vpop.trf.xlu0
        %v673 = vpop.trf.xlu0
        %v674 = vpop.trf.xlu0
        %v675 = vpop.trf.xlu0
        %v676 = vpop.trf.xlu0
        %v677 = vpop.trf.xlu0
        %v678 = vpop.trf.xlu0
        %v679 = vpop.trf.xlu0
        %v680 = vpop.trf.xlu0
        %v681 = vpop.trf.xlu0
        %682 = vxpose.xlu0.b32.start [1/16] %v484, 128
        %683 = vxpose.xlu0.b32.cont [2/16] 0.0, 128
        %684 = vxpose.xlu0.b32.cont [3/16] 0.0, 128
        %685 = vxpose.xlu0.b32.cont [4/16] 0.0, 128
        %686 = vxpose.xlu0.b32.cont [5/16] 0.0, 128
        %687 = vxpose.xlu0.b32.cont [6/16] 0.0, 128
        %688 = vxpose.xlu0.b32.cont [7/16] 0.0, 128
        %689 = vxpose.xlu0.b32.cont [8/16] 0.0, 128
        %690 = vxpose.xlu0.b32.cont [9/16] 0.0, 128
        %691 = vxpose.xlu0.b32.cont [10/16] 0.0, 128
        %692 = vxpose.xlu0.b32.cont [11/16] 0.0, 128
        %693 = vxpose.xlu0.b32.cont [12/16] 0.0, 128
        %694 = vxpose.xlu0.b32.cont [13/16] 0.0, 128
        %695 = vxpose.xlu0.b32.cont [14/16] 0.0, 128
        %696 = vxpose.xlu0.b32.cont [15/16] 0.0, 128
        %697 = vxpose.xlu0.b32.end [16/16] 0.0, 128
        %v698 = vpop.trf.xlu0
        %v699 = vpop.trf.xlu0
        %v700 = vpop.trf.xlu0
        %v701 = vpop.trf.xlu0
        %v702 = vpop.trf.xlu0
        %v703 = vpop.trf.xlu0
        %v704 = vpop.trf.xlu0
        %v705 = vpop.trf.xlu0
        %v706 = vpop.trf.xlu0
        %v707 = vpop.trf.xlu0
        %v708 = vpop.trf.xlu0
        %v709 = vpop.trf.xlu0
        %v710 = vpop.trf.xlu0
        %v711 = vpop.trf.xlu0
        %v712 = vpop.trf.xlu0
        %v713 = vpop.trf.xlu0
        %714 = vxpose.xlu0.b32.start [1/16] %v487, 128
        %715 = vxpose.xlu0.b32.cont [2/16] 0.0, 128
        %716 = vxpose.xlu0.b32.cont [3/16] 0.0, 128
        %717 = vxpose.xlu0.b32.cont [4/16] 0.0, 128
        %718 = vxpose.xlu0.b32.cont [5/16] 0.0, 128
        %719 = vxpose.xlu0.b32.cont [6/16] 0.0, 128
        %720 = vxpose.xlu0.b32.cont [7/16] 0.0, 128
        %721 = vxpose.xlu0.b32.cont [8/16] 0.0, 128
        %722 = vxpose.xlu0.b32.cont [9/16] 0.0, 128
        %723 = vxpose.xlu0.b32.cont [10/16] 0.0, 128
        %724 = vxpose.xlu0.b32.cont [11/16] 0.0, 128
        %725 = vxpose.xlu0.b32.cont [12/16] 0.0, 128
        %726 = vxpose.xlu0.b32.cont [13/16] 0.0, 128
        %727 = vxpose.xlu0.b32.cont [14/16] 0.0, 128
        %728 = vxpose.xlu0.b32.cont [15/16] 0.0, 128
        %729 = vxpose.xlu0.b32.end [16/16] 0.0, 128
        %v730 = vpop.trf.xlu0
        %v731 = vpop.trf.xlu0
        %v732 = vpop.trf.xlu0
        %v733 = vpop.trf.xlu0
        %v734 = vpop.trf.xlu0
        %v735 = vpop.trf.xlu0
        %v736 = vpop.trf.xlu0
        %v737 = vpop.trf.xlu0
        %v738 = vpop.trf.xlu0
        %v739 = vpop.trf.xlu0
        %v740 = vpop.trf.xlu0
        %v741 = vpop.trf.xlu0
        %v742 = vpop.trf.xlu0
        %v743 = vpop.trf.xlu0
        %v744 = vpop.trf.xlu0
        %v745 = vpop.trf.xlu0
        %vm746 = vcmask 64512
        %v747 = vsel %vm746, %v506, -inf
        %748 = vmax.xlane.f32.xlu0 %v747
        %v749 = vpop.xlane.xlu0 %748
        %v750 = vsel %vm746, %v507, -inf
        %751 = vmax.xlane.f32.xlu0 %v750
        %v752 = vpop.xlane.xlu0 %751
        %v753 = vsel %vm746, %v538, -inf
        %754 = vmax.xlane.f32.xlu0 %v753
        %v755 = vpop.xlane.xlu0 %754
        %v756 = vsel %vm746, %v539, -inf
        %757 = vmax.xlane.f32.xlu0 %v756
        %v758 = vpop.xlane.xlu0 %757
        %v759 = vsel %vm746, %v570, -inf
        %760 = vmax.xlane.f32.xlu0 %v759
        %v761 = vpop.xlane.xlu0 %760
        %v762 = vsel %vm746, %v571, -inf
        %763 = vmax.xlane.f32.xlu0 %v762
        %v764 = vpop.xlane.xlu0 %763
        %v765 = vsel %vm746, %v602, -inf
        %766 = vmax.xlane.f32.xlu0 %v765
        %v767 = vpop.xlane.xlu0 %766
        %v768 = vsel %vm746, %v603, -inf
        %769 = vmax.xlane.f32.xlu0 %v768
        %v770 = vpop.xlane.xlu0 %769
        %v771 = vsel %vm746, %v634, -inf
        %772 = vmax.xlane.f32.xlu0 %v771
        %v773 = vpop.xlane.xlu0 %772
        %v774 = vsel %vm746, %v635, -inf
        %775 = vmax.xlane.f32.xlu0 %v774
        %v776 = vpop.xlane.xlu0 %775
        %v777 = vsel %vm746, %v666, -inf
        %778 = vmax.xlane.f32.xlu0 %v777
        %v779 = vpop.xlane.xlu0 %778
        %v780 = vsel %vm746, %v667, -inf
        %781 = vmax.xlane.f32.xlu0 %v780
        %v782 = vpop.xlane.xlu0 %781
        %v783 = vsel %vm746, %v698, -inf
        %784 = vmax.xlane.f32.xlu0 %v783
        %v785 = vpop.xlane.xlu0 %784
        %v786 = vsel %vm746, %v699, -inf
        %787 = vmax.xlane.f32.xlu0 %v786
        %v788 = vpop.xlane.xlu0 %787
        %v789 = vsel %vm746, %v730, -inf
        %790 = vmax.xlane.f32.xlu0 %v789
        %v791 = vpop.xlane.xlu0 %790
        %v792 = vsel %vm746, %v731, -inf
        %793 = vmax.xlane.f32.xlu0 %v792
        %v794 = vpop.xlane.xlu0 %793
        %v795 = vsub.f32 %v506, %v749
        %v796 = vsub.f32 %v507, %v752
        %v797 = vsub.f32 %v538, %v755
        %v798 = vsub.f32 %v539, %v758
        %v799 = vsub.f32 %v570, %v761
        %v800 = vsub.f32 %v571, %v764
        %v801 = vsub.f32 %v602, %v767
        %v802 = vsub.f32 %v603, %v770
        %v803 = vsub.f32 %v634, %v773
        %v804 = vsub.f32 %v635, %v776
        %v805 = vsub.f32 %v666, %v779
        %v806 = vsub.f32 %v667, %v782
        %v807 = vsub.f32 %v698, %v785
        %v808 = vsub.f32 %v699, %v788
        %v809 = vsub.f32 %v730, %v791
        %v810 = vsub.f32 %v731, %v794
        %v811 = vmul.f32 %v795, 1.442695
        %v812 = vpow.pop %v811
        %v813 = vmul.f32 %v796, 1.442695
        %v814 = vpow.pop %v813
        %v815 = vmul.f32 %v797, 1.442695
        %v816 = vpow.pop %v815
        %v817 = vmul.f32 %v798, 1.442695
        %v818 = vpow.pop %v817
        %v819 = vmul.f32 %v799, 1.442695
        %v820 = vpow.pop %v819
        %v821 = vmul.f32 %v800, 1.442695
        %v822 = vpow.pop %v821
        %v823 = vmul.f32 %v801, 1.442695
        %v824 = vpow.pop %v823
        %v825 = vmul.f32 %v802, 1.442695
        %v826 = vpow.pop %v825
        %v827 = vmul.f32 %v803, 1.442695
        %v828 = vpow.pop %v827
        %v829 = vmul.f32 %v804, 1.442695
        %v830 = vpow.pop %v829
        %v831 = vmul.f32 %v805, 1.442695
        %v832 = vpow.pop %v831
        %v833 = vmul.f32 %v806, 1.442695
        %v834 = vpow.pop %v833
        %v835 = vmul.f32 %v807, 1.442695
        %v836 = vpow.pop %v835
        %v837 = vmul.f32 %v808, 1.442695
        %v838 = vpow.pop %v837
        %v839 = vmul.f32 %v809, 1.442695
        %v840 = vpow.pop %v839
        %v841 = vmul.f32 %v810, 1.442695
        %v842 = vpow.pop %v841
        %v843 = vsel %vm746, %v812, 0.0
        %844 = vadd.xlane.f32.xlu0 %v843
        %v845 = vpop.xlane.xlu0 %844
        %v846 = vsel %vm746, %v814, 0.0
        %847 = vadd.xlane.f32.xlu0 %v846
        %v848 = vpop.xlane.xlu0 %847
        %v849 = vsel %vm746, %v816, 0.0
        %850 = vadd.xlane.f32.xlu0 %v849
        %v851 = vpop.xlane.xlu0 %850
        %v852 = vsel %vm746, %v818, 0.0
        %853 = vadd.xlane.f32.xlu0 %v852
        %v854 = vpop.xlane.xlu0 %853
        %v855 = vsel %vm746, %v820, 0.0
        %856 = vadd.xlane.f32.xlu0 %v855
        %v857 = vpop.xlane.xlu0 %856
        %v858 = vsel %vm746, %v822, 0.0
        %859 = vadd.xlane.f32.xlu0 %v858
        %v860 = vpop.xlane.xlu0 %859
        %v861 = vsel %vm746, %v824, 0.0
        %862 = vadd.xlane.f32.xlu0 %v861
        %v863 = vpop.xlane.xlu0 %862
        %v864 = vsel %vm746, %v826, 0.0
        %865 = vadd.xlane.f32.xlu0 %v864
        %v866 = vpop.xlane.xlu0 %865
        %v867 = vsel %vm746, %v828, 0.0
        %868 = vadd.xlane.f32.xlu0 %v867
        %v869 = vpop.xlane.xlu0 %868
        %v870 = vsel %vm746, %v830, 0.0
        %871 = vadd.xlane.f32.xlu0 %v870
        %v872 = vpop.xlane.xlu0 %871
        %v873 = vsel %vm746, %v832, 0.0
        %874 = vadd.xlane.f32.xlu0 %v873
        %v875 = vpop.xlane.xlu0 %874
        %v876 = vsel %vm746, %v834, 0.0
        %877 = vadd.xlane.f32.xlu0 %v876
        %v878 = vpop.xlane.xlu0 %877
        %v879 = vsel %vm746, %v836, 0.0
        %880 = vadd.xlane.f32.xlu0 %v879
        %v881 = vpop.xlane.xlu0 %880
        %v882 = vsel %vm746, %v838, 0.0
        %883 = vadd.xlane.f32.xlu0 %v882
        %v884 = vpop.xlane.xlu0 %883
        %v885 = vsel %vm746, %v840, 0.0
        %886 = vadd.xlane.f32.xlu0 %v885
        %v887 = vpop.xlane.xlu0 %886
        %v888 = vsel %vm746, %v842, 0.0
        %889 = vadd.xlane.f32.xlu0 %v888
        %v890 = vpop.xlane.xlu0 %889
        %v891 = vrcp.pop %v845
        %v892 = vrcp.pop %v848
        %v893 = vrcp.pop %v851
        %v894 = vrcp.pop %v854
        %v895 = vrcp.pop %v857
        %v896 = vrcp.pop %v860
        %v897 = vrcp.pop %v863
        %v898 = vrcp.pop %v866
        %v899 = vrcp.pop %v869
        %v900 = vrcp.pop %v872
        %v901 = vrcp.pop %v875
        %v902 = vrcp.pop %v878
        %v903 = vrcp.pop %v881
        %v904 = vrcp.pop %v884
        %v905 = vrcp.pop %v887
        %v906 = vrcp.pop %v890
        %v907 = vmul.f32 %v812, %v891
        %v908 = vmul.f32 %v814, %v892
        %v909 = vmul.f32 %v816, %v893
        %v910 = vmul.f32 %v818, %v894
        %v911 = vmul.f32 %v820, %v895
        %v912 = vmul.f32 %v822, %v896
        %v913 = vmul.f32 %v824, %v897
        %v914 = vmul.f32 %v826, %v898
        %v915 = vmul.f32 %v828, %v899
        %v916 = vmul.f32 %v830, %v900
        %v917 = vmul.f32 %v832, %v901
        %v918 = vmul.f32 %v834, %v902
        %v919 = vmul.f32 %v836, %v903
        %v920 = vmul.f32 %v838, %v904
        %v921 = vmul.f32 %v840, %v905
        %v922 = vmul.f32 %v842, %v906
        %v923 = vld [vmem:[%s3] sm:$0xf]
        %v924 = vld [vmem:[%s3 + $0x4] sm:$0xf]
        %v925 = vld [vmem:[%s3 + $0x8] sm:$0xf]
        %v926 = vld [vmem:[%s3 + $0xc] sm:$0xf]
        %v927 = vld [vmem:[%s4] sm:$0x1]
        %v929 = vlaneseq
        %v930 = vshrl.u32 %v929, 7
        %v931 = vsub.s32 0, %v930
        %v932 = vrot.slane %v927, %v931
        %v938 = vunpack.c.l.b16 %v923
        %v939 = vunpack.c.l.b16 %v924
        %v940 = vunpack.c.l.b16 %v925
        %v941 = vunpack.c.l.b16 %v926
        %v942 = vpack.c.b16 %v939, %v938
        %v943 = vpack.c.b16 %v941, %v940
        %946 = vmatprep.subr.bf16.mxu0 0
        %947 = vmatpush1.bf16.msra.mxu0 %v942
        %948 = vmatprep.subr.bf16.mxu0 0
        %949 = vmatpush1.bf16.msra.mxu0 %v943
        %950 = vmatprep.subr.bf16.mxu0 0
        %951 = vmatpush1.bf16.msra.mxu0 0
        %952 = vmatprep.subr.bf16.mxu0 0
        %953 = vmatpush1.bf16.msra.mxu0 0
        %954 = vmatprep.subr.bf16.mxu0 0
        %955 = vmatpush1.bf16.msra.mxu0 0
        %956 = vmatprep.subr.bf16.mxu0 0
        %957 = vmatpush1.bf16.msra.mxu0 0
        %958 = vmatprep.subr.bf16.mxu0 0
        %959 = vmatpush1.bf16.msra.mxu0 0
        %960 = vmatprep.subr.bf16.mxu0 0
        %961 = vmatpush1.bf16.msra.mxu0 0
        %962 = vmatprep.subr.bf16.mxu0 0
        %963 = vmatpush1.bf16.msra.mxu0 0
        %964 = vmatprep.subr.bf16.mxu0 0
        %965 = vmatpush1.bf16.msra.mxu0 0
        %966 = vmatprep.subr.bf16.mxu0 0
        %967 = vmatpush1.bf16.msra.mxu0 0
        %968 = vmatprep.subr.bf16.mxu0 0
        %969 = vmatpush1.bf16.msra.mxu0 0
        %970 = vmatprep.subr.bf16.mxu0 0
        %971 = vmatpush1.bf16.msra.mxu0 0
        %972 = vmatprep.subr.bf16.mxu0 0
        %973 = vmatpush1.bf16.msra.mxu0 0
        %974 = vmatprep.subr.bf16.mxu0 0
        %975 = vmatpush1.bf16.msra.mxu0 0
        %976 = vmatprep.subr.bf16.mxu0 0
        %977 = vmatpush1.bf16.msra.mxu0 0
        %978 = vmatprep.mubr.bf16.mxu0 0
        %979 = vmatmul.mubr.bf16.gmra.mrb[0].mxu0 %v414
        %v980 = vpop.f32.mrb[0].mxu0
        %v981 = vadd.f32 %v932, %v980
        %v982 = vpop.f32.mrb[0].mxu0
        %v983 = vpop.f32.mrb[0].mxu0
        %v984 = vadd.f32 %v932, %v983
        %v985 = vpop.f32.mrb[0].mxu0
        %986 = vmatprep.mubr.bf16.mxu0 0
        %987 = vmatmul.mubr.bf16.gmra.mrb[0].mxu0 %v417
        %v988 = vpop.f32.mrb[0].mxu0
        %v989 = vadd.f32 %v932, %v988
        %v990 = vpop.f32.mrb[0].mxu0
        %v991 = vpop.f32.mrb[0].mxu0
        %v992 = vadd.f32 %v932, %v991
        %v993 = vpop.f32.mrb[0].mxu0
        %994 = vmatprep.mubr.bf16.mxu0 0
        %995 = vmatmul.mubr.bf16.gmra.mrb[0].mxu0 %v420
        %v996 = vpop.f32.mrb[0].mxu0
        %v997 = vadd.f32 %v932, %v996
        %v998 = vpop.f32.mrb[0].mxu0
        %v999 = vpop.f32.mrb[0].mxu0
        %v1000 = vadd.f32 %v932, %v999
        %v1001 = vpop.f32.mrb[0].mxu0
        %1002 = vmatprep.mubr.bf16.mxu0 0
        %1003 = vmatmul.mubr.bf16.gmra.mrb[0].mxu0 %v423
        %v1004 = vpop.f32.mrb[0].mxu0
        %v1005 = vadd.f32 %v932, %v1004
        %v1006 = vpop.f32.mrb[0].mxu0
        %v1007 = vpop.f32.mrb[0].mxu0
        %v1008 = vadd.f32 %v932, %v1007
        %v1009 = vpop.f32.mrb[0].mxu0
        %1010 = vdwg.mxu0
        %v1011 = vpack.c.bf16 %v984, %v981
        %v1012 = vpack.c.bf16 %v992, %v989
        %v1013 = vpack.c.bf16 %v1000, %v997
        %v1014 = vpack.c.bf16 %v1008, %v1005
        %v1019 = vunpack.c.l.b16 %v1011
        %v1020 = vunpack.c.h.b16 %v1011
        %v1021 = vunpack.c.l.b16 %v1012
        %v1022 = vunpack.c.h.b16 %v1012
        %v1023 = vunpack.c.l.b16 %v1013
        %v1024 = vunpack.c.h.b16 %v1013
        %v1025 = vunpack.c.l.b16 %v1014
        %v1026 = vunpack.c.h.b16 %v1014
        %v1027 = vpack.c.b16 %v1019, %v1019
        %v1028 = vpack.c.b16 %v1020, %v1020
        %v1029 = vpack.c.b16 %v1021, %v1021
        %v1030 = vpack.c.b16 %v1022, %v1022
        %v1031 = vpack.c.b16 %v1023, %v1023
        %v1032 = vpack.c.b16 %v1024, %v1024
        %v1033 = vpack.c.b16 %v1025, %v1025
        %v1034 = vpack.c.b16 %v1026, %v1026
        %v1035 = vpack.c.bf16 %v908, %v907
        %v1036 = vpack.c.bf16 %v910, %v909
        %v1037 = vpack.c.bf16 %v912, %v911
        %v1038 = vpack.c.bf16 %v914, %v913
        %v1039 = vpack.c.bf16 %v916, %v915
        %v1040 = vpack.c.bf16 %v918, %v917
        %v1041 = vpack.c.bf16 %v920, %v919
        %v1042 = vpack.c.bf16 %v922, %v921
        %v1044 = vsel %vm746, %v1035, 0
        %vm1046 = vcmask 1043456
        %v1048 = vsel %vm1046, %v1027, 0
        %1050 = vmatprep.subr.bf16.mxu0 0
        %1051 = vmatpush1.bf16.msra.mxu0 %v1048
        %1052 = vmatprep.subr.bf16.mxu0 0
        %1053 = vmatpush1.bf16.msra.mxu0 0
        %1054 = vmatprep.subr.bf16.mxu0 0
        %1055 = vmatpush1.bf16.msra.mxu0 0
        %1056 = vmatprep.subr.bf16.mxu0 0
        %1057 = vmatpush1.bf16.msra.mxu0 0
        %1058 = vmatprep.subr.bf16.mxu0 0
        %1059 = vmatpush1.bf16.msra.mxu0 0
        %1060 = vmatprep.subr.bf16.mxu0 0
        %1061 = vmatpush1.bf16.msra.mxu0 0
        %1062 = vmatprep.subr.bf16.mxu0 0
        %1063 = vmatpush1.bf16.msra.mxu0 0
        %1064 = vmatprep.subr.bf16.mxu0 0
        %1065 = vmatpush1.bf16.msra.mxu0 0
        %1066 = vmatprep.subr.bf16.mxu0 0
        %1067 = vmatpush1.bf16.msra.mxu0 0
        %1068 = vmatprep.subr.bf16.mxu0 0
        %1069 = vmatpush1.bf16.msra.mxu0 0
        %1070 = vmatprep.subr.bf16.mxu0 0
        %1071 = vmatpush1.bf16.msra.mxu0 0
        %1072 = vmatprep.subr.bf16.mxu0 0
        %1073 = vmatpush1.bf16.msra.mxu0 0
        %1074 = vmatprep.subr.bf16.mxu0 0
        %1075 = vmatpush1.bf16.msra.mxu0 0
        %1076 = vmatprep.subr.bf16.mxu0 0
        %1077 = vmatpush1.bf16.msra.mxu0 0
        %1078 = vmatprep.subr.bf16.mxu0 0
        %1079 = vmatpush1.bf16.msra.mxu0 0
        %1080 = vmatprep.subr.bf16.mxu0 0
        %1081 = vmatpush1.bf16.msra.mxu0 0
        %1082 = vmatprep.mubr.bf16.mxu0 0
        %1083 = vmatmul.mubr.bf16.gmra.mrb[0].mxu0 %v1044
        %v1084 = vpop.f32.mrb[0].mxu0
        %v1085 = vadd.f32 0.0, %v1084
        %v1086 = vpop.f32.mrb[0].mxu0
        %v1087 = vpop.f32.mrb[0].mxu0
        %v1088 = vadd.f32 0.0, %v1087
        %v1089 = vpop.f32.mrb[0].mxu0
        %1090 = vdwg.mxu0
        %v1092 = vsel %vm746, %v1036, 0
        %v1095 = vsel %vm1046, %v1028, 0
        %1097 = vmatprep.subr.bf16.mxu0 0
        %1098 = vmatpush1.bf16.msra.mxu0 %v1095
        %1099 = vmatprep.subr.bf16.mxu0 0
        %1100 = vmatpush1.bf16.msra.mxu0 0
        %1101 = vmatprep.subr.bf16.mxu0 0
        %1102 = vmatpush1.bf16.msra.mxu0 0
        %1103 = vmatprep.subr.bf16.mxu0 0
        %1104 = vmatpush1.bf16.msra.mxu0 0
        %1105 = vmatprep.subr.bf16.mxu0 0
        %1106 = vmatpush1.bf16.msra.mxu0 0
        %1107 = vmatprep.subr.bf16.mxu0 0
        %1108 = vmatpush1.bf16.msra.mxu0 0
        %1109 = vmatprep.subr.bf16.mxu0 0
        %1110 = vmatpush1.bf16.msra.mxu0 0
        %1111 = vmatprep.subr.bf16.mxu0 0
        %1112 = vmatpush1.bf16.msra.mxu0 0
        %1113 = vmatprep.subr.bf16.mxu0 0
        %1114 = vmatpush1.bf16.msra.mxu0 0
        %1115 = vmatprep.subr.bf16.mxu0 0
        %1116 = vmatpush1.bf16.msra.mxu0 0
        %1117 = vmatprep.subr.bf16.mxu0 0
        %1118 = vmatpush1.bf16.msra.mxu0 0
        %1119 = vmatprep.subr.bf16.mxu0 0
        %1120 = vmatpush1.bf16.msra.mxu0 0
        %1121 = vmatprep.subr.bf16.mxu0 0
        %1122 = vmatpush1.bf16.msra.mxu0 0
        %1123 = vmatprep.subr.bf16.mxu0 0
        %1124 = vmatpush1.bf16.msra.mxu0 0
        %1125 = vmatprep.subr.bf16.mxu0 0
        %1126 = vmatpush1.bf16.msra.mxu0 0
        %1127 = vmatprep.subr.bf16.mxu0 0
        %1128 = vmatpush1.bf16.msra.mxu0 0
        %1129 = vmatprep.mubr.bf16.mxu0 0
        %1130 = vmatmul.mubr.bf16.gmra.mrb[0].mxu0 %v1092
        %v1131 = vpop.f32.mrb[0].mxu0
        %v1132 = vadd.f32 0.0, %v1131
        %v1133 = vpop.f32.mrb[0].mxu0
        %v1134 = vpop.f32.mrb[0].mxu0
        %v1135 = vadd.f32 0.0, %v1134
        %v1136 = vpop.f32.mrb[0].mxu0
        %1137 = vdwg.mxu0
        %v1139 = vsel %vm746, %v1037, 0
        %v1142 = vsel %vm1046, %v1029, 0
        %1144 = vmatprep.subr.bf16.mxu0 0
        %1145 = vmatpush1.bf16.msra.mxu0 %v1142
        %1146 = vmatprep.subr.bf16.mxu0 0
        %1147 = vmatpush1.bf16.msra.mxu0 0
        %1148 = vmatprep.subr.bf16.mxu0 0
        %1149 = vmatpush1.bf16.msra.mxu0 0
        %1150 = vmatprep.subr.bf16.mxu0 0
        %1151 = vmatpush1.bf16.msra.mxu0 0
        %1152 = vmatprep.subr.bf16.mxu0 0
        %1153 = vmatpush1.bf16.msra.mxu0 0
        %1154 = vmatprep.subr.bf16.mxu0 0
        %1155 = vmatpush1.bf16.msra.mxu0 0
        %1156 = vmatprep.subr.bf16.mxu0 0
        %1157 = vmatpush1.bf16.msra.mxu0 0
        %1158 = vmatprep.subr.bf16.mxu0 0
        %1159 = vmatpush1.bf16.msra.mxu0 0
        %1160 = vmatprep.subr.bf16.mxu0 0
        %1161 = vmatpush1.bf16.msra.mxu0 0
        %1162 = vmatprep.subr.bf16.mxu0 0
        %1163 = vmatpush1.bf16.msra.mxu0 0
        %1164 = vmatprep.subr.bf16.mxu0 0
        %1165 = vmatpush1.bf16.msra.mxu0 0
        %1166 = vmatprep.subr.bf16.mxu0 0
        %1167 = vmatpush1.bf16.msra.mxu0 0
        %1168 = vmatprep.subr.bf16.mxu0 0
        %1169 = vmatpush1.bf16.msra.mxu0 0
        %1170 = vmatprep.subr.bf16.mxu0 0
        %1171 = vmatpush1.bf16.msra.mxu0 0
        %1172 = vmatprep.subr.bf16.mxu0 0
        %1173 = vmatpush1.bf16.msra.mxu0 0
        %1174 = vmatprep.subr.bf16.mxu0 0
        %1175 = vmatpush1.bf16.msra.mxu0 0
        %1176 = vmatprep.mubr.bf16.mxu0 0
        %1177 = vmatmul.mubr.bf16.gmra.mrb[0].mxu0 %v1139
        %v1178 = vpop.f32.mrb[0].mxu0
        %v1179 = vadd.f32 0.0, %v1178
        %v1180 = vpop.f32.mrb[0].mxu0
        %v1181 = vpop.f32.mrb[0].mxu0
        %v1182 = vadd.f32 0.0, %v1181
        %v1183 = vpop.f32.mrb[0].mxu0
        %1184 = vdwg.mxu0
        %v1186 = vsel %vm746, %v1038, 0
        %v1189 = vsel %vm1046, %v1030, 0
        %1191 = vmatprep.subr.bf16.mxu0 0
        %1192 = vmatpush1.bf16.msra.mxu0 %v1189
        %1193 = vmatprep.subr.bf16.mxu0 0
        %1194 = vmatpush1.bf16.msra.mxu0 0
        %1195 = vmatprep.subr.bf16.mxu0 0
        %1196 = vmatpush1.bf16.msra.mxu0 0
        %1197 = vmatprep.subr.bf16.mxu0 0
        %1198 = vmatpush1.bf16.msra.mxu0 0
        %1199 = vmatprep.subr.bf16.mxu0 0
        %1200 = vmatpush1.bf16.msra.mxu0 0
        %1201 = vmatprep.subr.bf16.mxu0 0
        %1202 = vmatpush1.bf16.msra.mxu0 0
        %1203 = vmatprep.subr.bf16.mxu0 0
        %1204 = vmatpush1.bf16.msra.mxu0 0
        %1205 = vmatprep.subr.bf16.mxu0 0
        %1206 = vmatpush1.bf16.msra.mxu0 0
        %1207 = vmatprep.subr.bf16.mxu0 0
        %1208 = vmatpush1.bf16.msra.mxu0 0
        %1209 = vmatprep.subr.bf16.mxu0 0
        %1210 = vmatpush1.bf16.msra.mxu0 0
        %1211 = vmatprep.subr.bf16.mxu0 0
        %1212 = vmatpush1.bf16.msra.mxu0 0
        %1213 = vmatprep.subr.bf16.mxu0 0
        %1214 = vmatpush1.bf16.msra.mxu0 0
        %1215 = vmatprep.subr.bf16.mxu0 0
        %1216 = vmatpush1.bf16.msra.mxu0 0
        %1217 = vmatprep.subr.bf16.mxu0 0
        %1218 = vmatpush1.bf16.msra.mxu0 0
        %1219 = vmatprep.subr.bf16.mxu0 0
        %1220 = vmatpush1.bf16.msra.mxu0 0
        %1221 = vmatprep.subr.bf16.mxu0 0
        %1222 = vmatpush1.bf16.msra.mxu0 0
        %1223 = vmatprep.mubr.bf16.mxu0 0
        %1224 = vmatmul.mubr.bf16.gmra.mrb[0].mxu0 %v1186
        %v1225 = vpop.f32.mrb[0].mxu0
        %v1226 = vadd.f32 0.0, %v1225
        %v1227 = vpop.f32.mrb[0].mxu0
        %v1228 = vpop.f32.mrb[0].mxu0
        %v1229 = vadd.f32 0.0, %v1228
        %v1230 = vpop.f32.mrb[0].mxu0
        %1231 = vdwg.mxu0
        %v1233 = vsel %vm746, %v1039, 0
        %v1236 = vsel %vm1046, %v1031, 0
        %1238 = vmatprep.subr.bf16.mxu0 0
        %1239 = vmatpush1.bf16.msra.mxu0 %v1236
        %1240 = vmatprep.subr.bf16.mxu0 0
        %1241 = vmatpush1.bf16.msra.mxu0 0
        %1242 = vmatprep.subr.bf16.mxu0 0
        %1243 = vmatpush1.bf16.msra.mxu0 0
        %1244 = vmatprep.subr.bf16.mxu0 0
        %1245 = vmatpush1.bf16.msra.mxu0 0
        %1246 = vmatprep.subr.bf16.mxu0 0
        %1247 = vmatpush1.bf16.msra.mxu0 0
        %1248 = vmatprep.subr.bf16.mxu0 0
        %1249 = vmatpush1.bf16.msra.mxu0 0
        %1250 = vmatprep.subr.bf16.mxu0 0
        %1251 = vmatpush1.bf16.msra.mxu0 0
        %1252 = vmatprep.subr.bf16.mxu0 0
        %1253 = vmatpush1.bf16.msra.mxu0 0
        %1254 = vmatprep.subr.bf16.mxu0 0
        %1255 = vmatpush1.bf16.msra.mxu0 0
        %1256 = vmatprep.subr.bf16.mxu0 0
        %1257 = vmatpush1.bf16.msra.mxu0 0
        %1258 = vmatprep.subr.bf16.mxu0 0
        %1259 = vmatpush1.bf16.msra.mxu0 0
        %1260 = vmatprep.subr.bf16.mxu0 0
        %1261 = vmatpush1.bf16.msra.mxu0 0
        %1262 = vmatprep.subr.bf16.mxu0 0
        %1263 = vmatpush1.bf16.msra.mxu0 0
        %1264 = vmatprep.subr.bf16.mxu0 0
        %1265 = vmatpush1.bf16.msra.mxu0 0
        %1266 = vmatprep.subr.bf16.mxu0 0
        %1267 = vmatpush1.bf16.msra.mxu0 0
        %1268 = vmatprep.subr.bf16.mxu0 0
        %1269 = vmatpush1.bf16.msra.mxu0 0
        %1270 = vmatprep.mubr.bf16.mxu0 0
        %1271 = vmatmul.mubr.bf16.gmra.mrb[0].mxu0 %v1233
        %v1272 = vpop.f32.mrb[0].mxu0
        %v1273 = vadd.f32 0.0, %v1272
        %v1274 = vpop.f32.mrb[0].mxu0
        %v1275 = vpop.f32.mrb[0].mxu0
        %v1276 = vadd.f32 0.0, %v1275
        %v1277 = vpop.f32.mrb[0].mxu0
        %1278 = vdwg.mxu0
        %v1280 = vsel %vm746, %v1040, 0
        %v1283 = vsel %vm1046, %v1032, 0
        %1285 = vmatprep.subr.bf16.mxu0 0
        %1286 = vmatpush1.bf16.msra.mxu0 %v1283
        %1287 = vmatprep.subr.bf16.mxu0 0
        %1288 = vmatpush1.bf16.msra.mxu0 0
        %1289 = vmatprep.subr.bf16.mxu0 0
        %1290 = vmatpush1.bf16.msra.mxu0 0
        %1291 = vmatprep.subr.bf16.mxu0 0
        %1292 = vmatpush1.bf16.msra.mxu0 0
        %1293 = vmatprep.subr.bf16.mxu0 0
        %1294 = vmatpush1.bf16.msra.mxu0 0
        %1295 = vmatprep.subr.bf16.mxu0 0
        %1296 = vmatpush1.bf16.msra.mxu0 0
        %1297 = vmatprep.subr.bf16.mxu0 0
        %1298 = vmatpush1.bf16.msra.mxu0 0
        %1299 = vmatprep.subr.bf16.mxu0 0
        %1300 = vmatpush1.bf16.msra.mxu0 0
        %1301 = vmatprep.subr.bf16.mxu0 0
        %1302 = vmatpush1.bf16.msra.mxu0 0
        %1303 = vmatprep.subr.bf16.mxu0 0
        %1304 = vmatpush1.bf16.msra.mxu0 0
        %1305 = vmatprep.subr.bf16.mxu0 0
        %1306 = vmatpush1.bf16.msra.mxu0 0
        %1307 = vmatprep.subr.bf16.mxu0 0
        %1308 = vmatpush1.bf16.msra.mxu0 0
        %1309 = vmatprep.subr.bf16.mxu0 0
        %1310 = vmatpush1.bf16.msra.mxu0 0
        %1311 = vmatprep.subr.bf16.mxu0 0
        %1312 = vmatpush1.bf16.msra.mxu0 0
        %1313 = vmatprep.subr.bf16.mxu0 0
        %1314 = vmatpush1.bf16.msra.mxu0 0
        %1315 = vmatprep.subr.bf16.mxu0 0
        %1316 = vmatpush1.bf16.msra.mxu0 0
        %1317 = vmatprep.mubr.bf16.mxu0 0
        %1318 = vmatmul.mubr.bf16.gmra.mrb[0].mxu0 %v1280
        %v1319 = vpop.f32.mrb[0].mxu0
        %v1320 = vadd.f32 0.0, %v1319
        %v1321 = vpop.f32.mrb[0].mxu0
        %v1322 = vpop.f32.mrb[0].mxu0
        %v1323 = vadd.f32 0.0, %v1322
        %v1324 = vpop.f32.mrb[0].mxu0
        %1325 = vdwg.mxu0
        %v1327 = vsel %vm746, %v1041, 0
        %v1330 = vsel %vm1046, %v1033, 0
        %1332 = vmatprep.subr.bf16.mxu0 0
        %1333 = vmatpush1.bf16.msra.mxu0 %v1330
        %1334 = vmatprep.subr.bf16.mxu0 0
        %1335 = vmatpush1.bf16.msra.mxu0 0
        %1336 = vmatprep.subr.bf16.mxu0 0
        %1337 = vmatpush1.bf16.msra.mxu0 0
        %1338 = vmatprep.subr.bf16.mxu0 0
        %1339 = vmatpush1.bf16.msra.mxu0 0
        %1340 = vmatprep.subr.bf16.mxu0 0
        %1341 = vmatpush1.bf16.msra.mxu0 0
        %1342 = vmatprep.subr.bf16.mxu0 0
        %1343 = vmatpush1.bf16.msra.mxu0 0
        %1344 = vmatprep.subr.bf16.mxu0 0
        %1345 = vmatpush1.bf16.msra.mxu0 0
        %1346 = vmatprep.subr.bf16.mxu0 0
        %1347 = vmatpush1.bf16.msra.mxu0 0
        %1348 = vmatprep.subr.bf16.mxu0 0
        %1349 = vmatpush1.bf16.msra.mxu0 0
        %1350 = vmatprep.subr.bf16.mxu0 0
        %1351 = vmatpush1.bf16.msra.mxu0 0
        %1352 = vmatprep.subr.bf16.mxu0 0
        %1353 = vmatpush1.bf16.msra.mxu0 0
        %1354 = vmatprep.subr.bf16.mxu0 0
        %1355 = vmatpush1.bf16.msra.mxu0 0
        %1356 = vmatprep.subr.bf16.mxu0 0
        %1357 = vmatpush1.bf16.msra.mxu0 0
        %1358 = vmatprep.subr.bf16.mxu0 0
        %1359 = vmatpush1.bf16.msra.mxu0 0
        %1360 = vmatprep.subr.bf16.mxu0 0
        %1361 = vmatpush1.bf16.msra.mxu0 0
        %1362 = vmatprep.subr.bf16.mxu0 0
        %1363 = vmatpush1.bf16.msra.mxu0 0
        %1364 = vmatprep.mubr.bf16.mxu0 0
        %1365 = vmatmul.mubr.bf16.gmra.mrb[0].mxu0 %v1327
        %v1366 = vpop.f32.mrb[0].mxu0
        %v1367 = vadd.f32 0.0, %v1366
        %v1368 = vpop.f32.mrb[0].mxu0
        %v1369 = vpop.f32.mrb[0].mxu0
        %v1370 = vadd.f32 0.0, %v1369
        %v1371 = vpop.f32.mrb[0].mxu0
        %1372 = vdwg.mxu0
        %v1374 = vsel %vm746, %v1042, 0
        %v1377 = vsel %vm1046, %v1034, 0
        %1379 = vmatprep.subr.bf16.mxu0 0
        %1380 = vmatpush1.bf16.msra.mxu0 %v1377
        %1381 = vmatprep.subr.bf16.mxu0 0
        %1382 = vmatpush1.bf16.msra.mxu0 0
        %1383 = vmatprep.subr.bf16.mxu0 0
        %1384 = vmatpush1.bf16.msra.mxu0 0
        %1385 = vmatprep.subr.bf16.mxu0 0
        %1386 = vmatpush1.bf16.msra.mxu0 0
        %1387 = vmatprep.subr.bf16.mxu0 0
        %1388 = vmatpush1.bf16.msra.mxu0 0
        %1389 = vmatprep.subr.bf16.mxu0 0
        %1390 = vmatpush1.bf16.msra.mxu0 0
        %1391 = vmatprep.subr.bf16.mxu0 0
        %1392 = vmatpush1.bf16.msra.mxu0 0
        %1393 = vmatprep.subr.bf16.mxu0 0
        %1394 = vmatpush1.bf16.msra.mxu0 0
        %1395 = vmatprep.subr.bf16.mxu0 0
        %1396 = vmatpush1.bf16.msra.mxu0 0
        %1397 = vmatprep.subr.bf16.mxu0 0
        %1398 = vmatpush1.bf16.msra.mxu0 0
        %1399 = vmatprep.subr.bf16.mxu0 0
        %1400 = vmatpush1.bf16.msra.mxu0 0
        %1401 = vmatprep.subr.bf16.mxu0 0
        %1402 = vmatpush1.bf16.msra.mxu0 0
        %1403 = vmatprep.subr.bf16.mxu0 0
        %1404 = vmatpush1.bf16.msra.mxu0 0
        %1405 = vmatprep.subr.bf16.mxu0 0
        %1406 = vmatpush1.bf16.msra.mxu0 0
        %1407 = vmatprep.subr.bf16.mxu0 0
        %1408 = vmatpush1.bf16.msra.mxu0 0
        %1409 = vmatprep.subr.bf16.mxu0 0
        %1410 = vmatpush1.bf16.msra.mxu0 0
        %1411 = vmatprep.mubr.bf16.mxu0 0
        %1412 = vmatmul.mubr.bf16.gmra.mrb[0].mxu0 %v1374
        %v1413 = vpop.f32.mrb[0].mxu0
        %v1414 = vadd.f32 0.0, %v1413
        %v1415 = vpop.f32.mrb[0].mxu0
        %v1416 = vpop.f32.mrb[0].mxu0
        %v1417 = vadd.f32 0.0, %v1416
        %v1418 = vpop.f32.mrb[0].mxu0
        %1419 = vdwg.mxu0
        %v1436 = vcombine.high %v1085, %v1085
        %v1437 = vcombine.high %v1088, %v1088
        %v1438 = vcombine.high %v1132, %v1132
        %v1439 = vcombine.high %v1135, %v1135
        %v1440 = vcombine.high %v1179, %v1179
        %v1441 = vcombine.high %v1182, %v1182
        %v1442 = vcombine.high %v1226, %v1226
        %v1443 = vcombine.high %v1229, %v1229
        %v1444 = vcombine.high %v1273, %v1273
        %v1445 = vcombine.high %v1276, %v1276
        %v1446 = vcombine.high %v1320, %v1320
        %v1447 = vcombine.high %v1323, %v1323
        %v1448 = vcombine.high %v1367, %v1367
        %v1449 = vcombine.high %v1370, %v1370
        %v1450 = vcombine.high %v1414, %v1414
        %v1451 = vcombine.high %v1417, %v1417
        %v1468 = vld [vmem:[%s5] sm:$0x1]
        %v1469 = vld [vmem:[%s5 + $0x1] sm:$0x1]
        %v1470 = vld [vmem:[%s5 + $0x2] sm:$0x1]
        %v1471 = vld [vmem:[%s5 + $0x3] sm:$0x1]
        %v1476 = vlaneseq
        %v1477 = vshrl.u32 %v1476, 7
        %v1478 = vsub.s32 0, %v1477
        %v1479 = vrot.slane %v1468, %v1478
        %v1480 = vlaneseq
        %v1481 = vshrl.u32 %v1480, 7
        %v1482 = vsub.s32 0, %v1481
        %v1483 = vrot.slane %v1469, %v1482
        %v1484 = vlaneseq
        %v1485 = vshrl.u32 %v1484, 7
        %v1486 = vsub.s32 0, %v1485
        %v1487 = vrot.slane %v1470, %v1486
        %v1488 = vlaneseq
        %v1489 = vshrl.u32 %v1488, 7
        %v1490 = vsub.s32 0, %v1489
        %v1491 = vrot.slane %v1471, %v1490
        %v1496 = vmul.f32 %v1085, %v1479
        %v1497 = vmul.f32 %v1436, %v1483
        %v1498 = vmul.f32 %v1088, %v1487
        %v1499 = vmul.f32 %v1437, %v1491
        %v1500 = vmul.f32 %v1132, %v1479
        %v1501 = vmul.f32 %v1438, %v1483
        %v1502 = vmul.f32 %v1135, %v1487
        %v1503 = vmul.f32 %v1439, %v1491
        %v1504 = vmul.f32 %v1179, %v1479
        %v1505 = vmul.f32 %v1440, %v1483
        %v1506 = vmul.f32 %v1182, %v1487
        %v1507 = vmul.f32 %v1441, %v1491
        %v1508 = vmul.f32 %v1226, %v1479
        %v1509 = vmul.f32 %v1442, %v1483
        %v1510 = vmul.f32 %v1229, %v1487
        %v1511 = vmul.f32 %v1443, %v1491
        %v1512 = vmul.f32 %v1273, %v1479
        %v1513 = vmul.f32 %v1444, %v1483
        %v1514 = vmul.f32 %v1276, %v1487
        %v1515 = vmul.f32 %v1445, %v1491
        %v1516 = vmul.f32 %v1320, %v1479
        %v1517 = vmul.f32 %v1446, %v1483
        %v1518 = vmul.f32 %v1323, %v1487
        %v1519 = vmul.f32 %v1447, %v1491
        %v1520 = vmul.f32 %v1367, %v1479
        %v1521 = vmul.f32 %v1448, %v1483
        %v1522 = vmul.f32 %v1370, %v1487
        %v1523 = vmul.f32 %v1449, %v1491
        %v1524 = vmul.f32 %v1414, %v1479
        %v1525 = vmul.f32 %v1450, %v1483
        %v1526 = vmul.f32 %v1417, %v1487
        %v1527 = vmul.f32 %v1451, %v1491
        %vm1528 = vcmask 257024
        %v1529 = vsel %vm1528, %v1496, 0.0
        %v1530 = vsel %vm1528, %v1497, 0.0
        %v1531 = vadd.f32 %v1529, %v1530
        %v1532 = vsel %vm1528, %v1498, 0.0
        %v1533 = vadd.f32 %v1531, %v1532
        %v1534 = vsel %vm1528, %v1499, 0.0
        %v1535 = vadd.f32 %v1533, %v1534
        %v1536 = vsel %vm1528, %v1500, 0.0
        %v1537 = vsel %vm1528, %v1501, 0.0
        %v1538 = vadd.f32 %v1536, %v1537
        %v1539 = vsel %vm1528, %v1502, 0.0
        %v1540 = vadd.f32 %v1538, %v1539
        %v1541 = vsel %vm1528, %v1503, 0.0
        %v1542 = vadd.f32 %v1540, %v1541
        %v1543 = vsel %vm1528, %v1504, 0.0
        %v1544 = vsel %vm1528, %v1505, 0.0
        %v1545 = vadd.f32 %v1543, %v1544
        %v1546 = vsel %vm1528, %v1506, 0.0
        %v1547 = vadd.f32 %v1545, %v1546
        %v1548 = vsel %vm1528, %v1507, 0.0
        %v1549 = vadd.f32 %v1547, %v1548
        %v1550 = vsel %vm1528, %v1508, 0.0
        %v1551 = vsel %vm1528, %v1509, 0.0
        %v1552 = vadd.f32 %v1550, %v1551
        %v1553 = vsel %vm1528, %v1510, 0.0
        %v1554 = vadd.f32 %v1552, %v1553
        %v1555 = vsel %vm1528, %v1511, 0.0
        %v1556 = vadd.f32 %v1554, %v1555
        %v1557 = vsel %vm1528, %v1512, 0.0
        %v1558 = vsel %vm1528, %v1513, 0.0
        %v1559 = vadd.f32 %v1557, %v1558
        %v1560 = vsel %vm1528, %v1514, 0.0
        %v1561 = vadd.f32 %v1559, %v1560
        %v1562 = vsel %vm1528, %v1515, 0.0
        %v1563 = vadd.f32 %v1561, %v1562
        %v1564 = vsel %vm1528, %v1516, 0.0
        %v1565 = vsel %vm1528, %v1517, 0.0
        %v1566 = vadd.f32 %v1564, %v1565
        %v1567 = vsel %vm1528, %v1518, 0.0
        %v1568 = vadd.f32 %v1566, %v1567
        %v1569 = vsel %vm1528, %v1519, 0.0
        %v1570 = vadd.f32 %v1568, %v1569
        %v1571 = vsel %vm1528, %v1520, 0.0
        %v1572 = vsel %vm1528, %v1521, 0.0
        %v1573 = vadd.f32 %v1571, %v1572
        %v1574 = vsel %vm1528, %v1522, 0.0
        %v1575 = vadd.f32 %v1573, %v1574
        %v1576 = vsel %vm1528, %v1523, 0.0
        %v1577 = vadd.f32 %v1575, %v1576
        %v1578 = vsel %vm1528, %v1524, 0.0
        %v1579 = vsel %vm1528, %v1525, 0.0
        %v1580 = vadd.f32 %v1578, %v1579
        %v1581 = vsel %vm1528, %v1526, 0.0
        %v1582 = vadd.f32 %v1580, %v1581
        %v1583 = vsel %vm1528, %v1527, 0.0
        %v1584 = vadd.f32 %v1582, %v1583
        %v1593 = vcombine.low %v1535, %v1542
        %v1594 = vcombine.low %v1549, %v1556
        %v1595 = vcombine.low %v1563, %v1570
        %v1596 = vcombine.low %v1577, %v1584
        %v1601 = vpack.c.bf16 %v1594, %v1593
        %v1602 = vpack.c.bf16 %v1596, %v1595
        %v1603 = vld [vmem:[%s6] sm:$0xf]
        %v1604 = vld [vmem:[%s6 + $0x4] sm:$0xf]
        %v1605 = vld [vmem:[%s6 + $0x8] sm:$0xf]
        %v1606 = vld [vmem:[%s6 + $0xc] sm:$0xf]
        %v1611 = vunpack.c.l.b16 %v1603
        %v1612 = vunpack.c.l.b16 %v1604
        %v1613 = vunpack.c.l.b16 %v1605
        %v1614 = vunpack.c.l.b16 %v1606
        %v1615 = vpack.c.b16 %v1612, %v1611
        %v1616 = vpack.c.b16 %v1614, %v1613
        %v1620 = vsel %vm412, %v1601, 0
        %v1623 = vsel %vm412, %v1602, 0
        %1625 = vmatprep.subr.bf16.mxu0 0
        %1626 = vmatpush1.bf16.msra.mxu0 %v1615
        %1627 = vmatprep.subr.bf16.mxu0 0
        %1628 = vmatpush1.bf16.msra.mxu0 %v1616
        %1629 = vmatprep.subr.bf16.mxu0 0
        %1630 = vmatpush1.bf16.msra.mxu0 0
        %1631 = vmatprep.subr.bf16.mxu0 0
        %1632 = vmatpush1.bf16.msra.mxu0 0
        %1633 = vmatprep.subr.bf16.mxu0 0
        %1634 = vmatpush1.bf16.msra.mxu0 0
        %1635 = vmatprep.subr.bf16.mxu0 0
        %1636 = vmatpush1.bf16.msra.mxu0 0
        %1637 = vmatprep.subr.bf16.mxu0 0
        %1638 = vmatpush1.bf16.msra.mxu0 0
        %1639 = vmatprep.subr.bf16.mxu0 0
        %1640 = vmatpush1.bf16.msra.mxu0 0
        %1641 = vmatprep.subr.bf16.mxu0 0
        %1642 = vmatpush1.bf16.msra.mxu0 0
        %1643 = vmatprep.subr.bf16.mxu0 0
        %1644 = vmatpush1.bf16.msra.mxu0 0
        %1645 = vmatprep.subr.bf16.mxu0 0
        %1646 = vmatpush1.bf16.msra.mxu0 0
        %1647 = vmatprep.subr.bf16.mxu0 0
        %1648 = vmatpush1.bf16.msra.mxu0 0
        %1649 = vmatprep.subr.bf16.mxu0 0
        %1650 = vmatpush1.bf16.msra.mxu0 0
        %1651 = vmatprep.subr.bf16.mxu0 0
        %1652 = vmatpush1.bf16.msra.mxu0 0
        %1653 = vmatprep.subr.bf16.mxu0 0
        %1654 = vmatpush1.bf16.msra.mxu0 0
        %1655 = vmatprep.subr.bf16.mxu0 0
        %1656 = vmatpush1.bf16.msra.mxu0 0
        %1657 = vmatprep.mubr.bf16.mxu0 0
        %1658 = vmatmul.mubr.bf16.gmra.mrb[0].mxu0 %v1620
        %v1659 = vpop.f32.mrb[0].mxu0
        %v1660 = vadd.f32 0.0, %v1659
        %v1661 = vpop.f32.mrb[0].mxu0
        %v1662 = vpop.f32.mrb[0].mxu0
        %v1663 = vadd.f32 0.0, %v1662
        %v1664 = vpop.f32.mrb[0].mxu0
        %1665 = vmatprep.mubr.bf16.mxu0 0
        %1666 = vmatmul.mubr.bf16.gmra.mrb[0].mxu0 %v1623
        %v1667 = vpop.f32.mrb[0].mxu0
        %v1668 = vadd.f32 0.0, %v1667
        %v1669 = vpop.f32.mrb[0].mxu0
        %v1670 = vpop.f32.mrb[0].mxu0
        %v1671 = vadd.f32 0.0, %v1670
        %v1672 = vpop.f32.mrb[0].mxu0
        %1673 = vdwg.mxu0
        %v1678 = vcombine.high %v1660, %v1660
        %v1679 = vcombine.high %v1663, %v1663
        %v1680 = vcombine.high %v1668, %v1668
        %v1681 = vcombine.high %v1671, %v1671
        %v1686 = vld [vmem:[%s7] sm:$0xf]
        %v1687 = vadd.f32 %v1660, %v1686
        %v1688 = vadd.f32 %v1678, %v1686
        %v1689 = vadd.f32 %v1663, %v1686
        %v1690 = vadd.f32 %v1679, %v1686
        %v1691 = vadd.f32 %v1668, %v1686
        %v1692 = vadd.f32 %v1680, %v1686
        %v1693 = vadd.f32 %v1671, %v1686
        %v1694 = vadd.f32 %v1681, %v1686
        %v1695 = vsel %vm1528, %v1687, 0.0
        %1696 = vadd.xlane.f32.xlu0 %v1695
        %v1697 = vpop.xlane.xlu0 %1696
        %v1698 = vsel %vm1528, %v1688, 0.0
        %1699 = vadd.xlane.f32.xlu0 %v1698
        %v1700 = vpop.xlane.xlu0 %1699
        %v1701 = vsel %vm1528, %v1689, 0.0
        %1702 = vadd.xlane.f32.xlu0 %v1701
        %v1703 = vpop.xlane.xlu0 %1702
        %v1704 = vsel %vm1528, %v1690, 0.0
        %1705 = vadd.xlane.f32.xlu0 %v1704
        %v1706 = vpop.xlane.xlu0 %1705
        %v1707 = vsel %vm1528, %v1691, 0.0
        %1708 = vadd.xlane.f32.xlu0 %v1707
        %v1709 = vpop.xlane.xlu0 %1708
        %v1710 = vsel %vm1528, %v1692, 0.0
        %1711 = vadd.xlane.f32.xlu0 %v1710
        %v1712 = vpop.xlane.xlu0 %1711
        %v1713 = vsel %vm1528, %v1693, 0.0
        %1714 = vadd.xlane.f32.xlu0 %v1713
        %v1715 = vpop.xlane.xlu0 %1714
        %v1716 = vsel %vm1528, %v1694, 0.0
        %1717 = vadd.xlane.f32.xlu0 %v1716
        %v1718 = vpop.xlane.xlu0 %1717
        %v1719 = vrcp.pop 32.0
        %v1720 = vmul.f32 %v1697, %v1719
        %v1721 = vmul.f32 %v1700, %v1719
        %v1722 = vmul.f32 %v1703, %v1719
        %v1723 = vmul.f32 %v1706, %v1719
        %v1724 = vmul.f32 %v1709, %v1719
        %v1725 = vmul.f32 %v1712, %v1719
        %v1726 = vmul.f32 %v1715, %v1719
        %v1727 = vmul.f32 %v1718, %v1719
        %v1728 = vsub.f32 %v1687, %v1720
        %v1729 = vsub.f32 %v1688, %v1721
        %v1730 = vsub.f32 %v1689, %v1722
        %v1731 = vsub.f32 %v1690, %v1723
        %v1732 = vsub.f32 %v1691, %v1724
        %v1733 = vsub.f32 %v1692, %v1725
        %v1734 = vsub.f32 %v1693, %v1726
        %v1735 = vsub.f32 %v1694, %v1727
        %v1736 = vmul.f32 %v1728, %v1728
        %v1737 = vmul.f32 %v1729, %v1729
        %v1738 = vmul.f32 %v1730, %v1730
        %v1739 = vmul.f32 %v1731, %v1731
        %v1740 = vmul.f32 %v1732, %v1732
        %v1741 = vmul.f32 %v1733, %v1733
        %v1742 = vmul.f32 %v1734, %v1734
        %v1743 = vmul.f32 %v1735, %v1735
        %v1744 = vsel %vm1528, %v1736, 0.0
        %1745 = vadd.xlane.f32.xlu0 %v1744
        %v1746 = vpop.xlane.xlu0 %1745
        %v1747 = vsel %vm1528, %v1737, 0.0
        %1748 = vadd.xlane.f32.xlu0 %v1747
        %v1749 = vpop.xlane.xlu0 %1748
        %v1750 = vsel %vm1528, %v1738, 0.0
        %1751 = vadd.xlane.f32.xlu0 %v1750
        %v1752 = vpop.xlane.xlu0 %1751
        %v1753 = vsel %vm1528, %v1739, 0.0
        %1754 = vadd.xlane.f32.xlu0 %v1753
        %v1755 = vpop.xlane.xlu0 %1754
        %v1756 = vsel %vm1528, %v1740, 0.0
        %1757 = vadd.xlane.f32.xlu0 %v1756
        %v1758 = vpop.xlane.xlu0 %1757
        %v1759 = vsel %vm1528, %v1741, 0.0
        %1760 = vadd.xlane.f32.xlu0 %v1759
        %v1761 = vpop.xlane.xlu0 %1760
        %v1762 = vsel %vm1528, %v1742, 0.0
        %1763 = vadd.xlane.f32.xlu0 %v1762
        %v1764 = vpop.xlane.xlu0 %1763
        %v1765 = vsel %vm1528, %v1743, 0.0
        %1766 = vadd.xlane.f32.xlu0 %v1765
        %v1767 = vpop.xlane.xlu0 %1766
        %v1768 = vmul.f32 %v1746, %v1719
        %v1769 = vmul.f32 %v1749, %v1719
        %v1770 = vmul.f32 %v1752, %v1719
        %v1771 = vmul.f32 %v1755, %v1719
        %v1772 = vmul.f32 %v1758, %v1719
        %v1773 = vmul.f32 %v1761, %v1719
        %v1774 = vmul.f32 %v1764, %v1719
        %v1775 = vmul.f32 %v1767, %v1719
        %v1776 = vadd.f32 %v1768, 1e-05
        %v1777 = vadd.f32 %v1769, 1e-05
        %v1778 = vadd.f32 %v1770, 1e-05
        %v1779 = vadd.f32 %v1771, 1e-05
        %v1780 = vadd.f32 %v1772, 1e-05
        %v1781 = vadd.f32 %v1773, 1e-05
        %v1782 = vadd.f32 %v1774, 1e-05
        %v1783 = vadd.f32 %v1775, 1e-05
        %v1784 = vrsqrt.pop %v1776
        %v1785 = vrsqrt.pop %v1777
        %v1786 = vrsqrt.pop %v1778
        %v1787 = vrsqrt.pop %v1779
        %v1788 = vrsqrt.pop %v1780
        %v1789 = vrsqrt.pop %v1781
        %v1790 = vrsqrt.pop %v1782
        %v1791 = vrsqrt.pop %v1783
        %v1792 = vmul.f32 %v1728, %v1784
        %v1793 = vmul.f32 %v1729, %v1785
        %v1794 = vmul.f32 %v1730, %v1786
        %v1795 = vmul.f32 %v1731, %v1787
        %v1796 = vmul.f32 %v1732, %v1788
        %v1797 = vmul.f32 %v1733, %v1789
        %v1798 = vmul.f32 %v1734, %v1790
        %v1799 = vmul.f32 %v1735, %v1791
        %v1808 = vlaneseq
        %v1809 = vshrl.u32 %v1808, 7
        %v1810 = vsub.s32 0, %v1809
        %v1811 = vrot.slane %v1792, %v1810
        %v1812 = vlaneseq
        %v1813 = vshrl.u32 %v1812, 7
        %v1814 = vsub.s32 0, %v1813
        %v1815 = vrot.slane %v1793, %v1814
        %v1816 = vlaneseq
        %v1817 = vshrl.u32 %v1816, 7
        %v1818 = vsub.s32 0, %v1817
        %v1819 = vrot.slane %v1794, %v1818
        %v1820 = vlaneseq
        %v1821 = vshrl.u32 %v1820, 7
        %v1822 = vsub.s32 0, %v1821
        %v1823 = vrot.slane %v1795, %v1822
        %v1824 = vlaneseq
        %v1825 = vshrl.u32 %v1824, 7
        %v1826 = vsub.s32 0, %v1825
        %v1827 = vrot.slane %v1796, %v1826
        %v1828 = vlaneseq
        %v1829 = vshrl.u32 %v1828, 7
        %v1830 = vsub.s32 0, %v1829
        %v1831 = vrot.slane %v1797, %v1830
        %v1832 = vlaneseq
        %v1833 = vshrl.u32 %v1832, 7
        %v1834 = vsub.s32 0, %v1833
        %v1835 = vrot.slane %v1798, %v1834
        %v1836 = vlaneseq
        %v1837 = vshrl.u32 %v1836, 7
        %v1838 = vsub.s32 0, %v1837
        %v1839 = vrot.slane %v1799, %v1838
        %vm1840 = vcmask 1041409
        %v1841 = vsel %vm1840, %v1815, %v1811
        %vm1842 = vcmask 1042434
        %v1843 = vsel %vm1842, %v1819, %v1841
        %vm1844 = vcmask 1043459
        %v1845 = vsel %vm1844, %v1823, %v1843
        %vm1846 = vcmask 1044484
        %v1847 = vsel %vm1846, %v1827, %v1845
        %vm1848 = vcmask 1045509
        %v1849 = vsel %vm1848, %v1831, %v1847
        %vm1850 = vcmask 1046534
        %v1851 = vsel %vm1850, %v1835, %v1849
        %vm1852 = vcmask 1047559
        %v1853 = vsel %vm1852, %v1839, %v1851
        %v1855 = vlaneseq
        %v1856 = vshrl.u32 %v1855, 7
        %v1857 = vsub.s32 1, %v1856
        %v1858 = vrot.slane %v1792, %v1857
        %v1859 = vlaneseq
        %v1860 = vshrl.u32 %v1859, 7
        %v1861 = vsub.s32 1, %v1860
        %v1862 = vrot.slane %v1793, %v1861
        %v1863 = vlaneseq
        %v1864 = vshrl.u32 %v1863, 7
        %v1865 = vsub.s32 1, %v1864
        %v1866 = vrot.slane %v1794, %v1865
        %v1867 = vlaneseq
        %v1868 = vshrl.u32 %v1867, 7
        %v1869 = vsub.s32 1, %v1868
        %v1870 = vrot.slane %v1795, %v1869
        %v1871 = vlaneseq
        %v1872 = vshrl.u32 %v1871, 7
        %v1873 = vsub.s32 1, %v1872
        %v1874 = vrot.slane %v1796, %v1873
        %v1875 = vlaneseq
        %v1876 = vshrl.u32 %v1875, 7
        %v1877 = vsub.s32 1, %v1876
        %v1878 = vrot.slane %v1797, %v1877
        %v1879 = vlaneseq
        %v1880 = vshrl.u32 %v1879, 7
        %v1881 = vsub.s32 1, %v1880
        %v1882 = vrot.slane %v1798, %v1881
        %v1883 = vlaneseq
        %v1884 = vshrl.u32 %v1883, 7
        %v1885 = vsub.s32 1, %v1884
        %v1886 = vrot.slane %v1799, %v1885
        %v1887 = vsel %vm1840, %v1862, %v1858
        %v1888 = vsel %vm1842, %v1866, %v1887
        %v1889 = vsel %vm1844, %v1870, %v1888
        %v1890 = vsel %vm1846, %v1874, %v1889
        %v1891 = vsel %vm1848, %v1878, %v1890
        %v1892 = vsel %vm1850, %v1882, %v1891
        %v1893 = vsel %vm1852, %v1886, %v1892
        %1894 = vrot.lane.b32.xlu0 %v1893, 32
        %v1895 = vpop.permute.xlu0 %1894
        %v1897 = vlaneseq
        %v1898 = vshrl.u32 %v1897, 7
        %v1899 = vsub.s32 2, %v1898
        %v1900 = vrot.slane %v1792, %v1899
        %v1901 = vlaneseq
        %v1902 = vshrl.u32 %v1901, 7
        %v1903 = vsub.s32 2, %v1902
        %v1904 = vrot.slane %v1793, %v1903
        %v1905 = vlaneseq
        %v1906 = vshrl.u32 %v1905, 7
        %v1907 = vsub.s32 2, %v1906
        %v1908 = vrot.slane %v1794, %v1907
        %v1909 = vlaneseq
        %v1910 = vshrl.u32 %v1909, 7
        %v1911 = vsub.s32 2, %v1910
        %v1912 = vrot.slane %v1795, %v1911
        %v1913 = vlaneseq
        %v1914 = vshrl.u32 %v1913, 7
        %v1915 = vsub.s32 2, %v1914
        %v1916 = vrot.slane %v1796, %v1915
        %v1917 = vlaneseq
        %v1918 = vshrl.u32 %v1917, 7
        %v1919 = vsub.s32 2, %v1918
        %v1920 = vrot.slane %v1797, %v1919
        %v1921 = vlaneseq
        %v1922 = vshrl.u32 %v1921, 7
        %v1923 = vsub.s32 2, %v1922
        %v1924 = vrot.slane %v1798, %v1923
        %v1925 = vlaneseq
        %v1926 = vshrl.u32 %v1925, 7
        %v1927 = vsub.s32 2, %v1926
        %v1928 = vrot.slane %v1799, %v1927
        %v1929 = vsel %vm1840, %v1904, %v1900
        %v1930 = vsel %vm1842, %v1908, %v1929
        %v1931 = vsel %vm1844, %v1912, %v1930
        %v1932 = vsel %vm1846, %v1916, %v1931
        %v1933 = vsel %vm1848, %v1920, %v1932
        %v1934 = vsel %vm1850, %v1924, %v1933
        %v1935 = vsel %vm1852, %v1928, %v1934
        %1936 = vrot.lane.b32.xlu0 %v1935, 64
        %v1937 = vpop.permute.xlu0 %1936
        %v1939 = vlaneseq
        %v1940 = vshrl.u32 %v1939, 7
        %v1941 = vsub.s32 3, %v1940
        %v1942 = vrot.slane %v1792, %v1941
        %v1943 = vlaneseq
        %v1944 = vshrl.u32 %v1943, 7
        %v1945 = vsub.s32 3, %v1944
        %v1946 = vrot.slane %v1793, %v1945
        %v1947 = vlaneseq
        %v1948 = vshrl.u32 %v1947, 7
        %v1949 = vsub.s32 3, %v1948
        %v1950 = vrot.slane %v1794, %v1949
        %v1951 = vlaneseq
        %v1952 = vshrl.u32 %v1951, 7
        %v1953 = vsub.s32 3, %v1952
        %v1954 = vrot.slane %v1795, %v1953
        %v1955 = vlaneseq
        %v1956 = vshrl.u32 %v1955, 7
        %v1957 = vsub.s32 3, %v1956
        %v1958 = vrot.slane %v1796, %v1957
        %v1959 = vlaneseq
        %v1960 = vshrl.u32 %v1959, 7
        %v1961 = vsub.s32 3, %v1960
        %v1962 = vrot.slane %v1797, %v1961
        %v1963 = vlaneseq
        %v1964 = vshrl.u32 %v1963, 7
        %v1965 = vsub.s32 3, %v1964
        %v1966 = vrot.slane %v1798, %v1965
        %v1967 = vlaneseq
        %v1968 = vshrl.u32 %v1967, 7
        %v1969 = vsub.s32 3, %v1968
        %v1970 = vrot.slane %v1799, %v1969
        %v1971 = vsel %vm1840, %v1946, %v1942
        %v1972 = vsel %vm1842, %v1950, %v1971
        %v1973 = vsel %vm1844, %v1954, %v1972
        %v1974 = vsel %vm1846, %v1958, %v1973
        %v1975 = vsel %vm1848, %v1962, %v1974
        %v1976 = vsel %vm1850, %v1966, %v1975
        %v1977 = vsel %vm1852, %v1970, %v1976
        %1978 = vrot.lane.b32.xlu0 %v1977, 96
        %v1979 = vpop.permute.xlu0 %1978
        %v1981 = vsel %vm412, %v1853, %v1895
        %vm1982 = vcmask 523264
        %v1983 = vsel %vm1982, %v1981, %v1937
        %vm1984 = vcmask 785408
        %v1985 = vsel %vm1984, %v1983, %v1979
        %v1986 = vld [vmem:[%s8] sm:$0x1]
        %v1988 = vlaneseq
        %v1989 = vshrl.u32 %v1988, 7
        %v1990 = vsub.s32 0, %v1989
        %v1991 = vrot.slane %v1986, %v1990
        %v1993 = vmul.f32 %v1985, %v1991
        %v1994 = vld [vmem:[%s9] sm:$0x1]
        %v1996 = vlaneseq
        %v1997 = vshrl.u32 %v1996, 7
        %v1998 = vsub.s32 0, %v1997
        %v1999 = vrot.slane %v1994, %v1998
        %v2001 = vadd.f32 %v1993, %v1999
        %2002 = vst [vmem:[%s353] sm:$0xff] %v2001
        %s2003 = sand.u32 %s247, 1
        %s2004 = scalar_lea.sflag [#allocation3], %s2003
        %s2005 = sand.u32 %s247, 1
        %s2006 = smul.addr %s2005, 8
        %s2007 = scalar_lea.vmem [#allocation2], %s2006
        // Predicated region
        $region61: #{tpu_custom_call.1} parent=59 // pred_check
          %p2008 = pneg %p257
        $region62: #{tpu_custom_call.1} parent=59 // pred_check_branch
          %2010 = sbr.rel (%p2008) target = $region64
        $region63: #{tpu_custom_call.1} parent=59 // pred_region
          %s2012 = ssub.s32 128, 128
          %2013 = vsyncadd %s2004, %s2012
          %s2014 = smul.addr %s24, 128
          %s2015 = scalar_lea.hbm %s10, %s2014
          %s2017 = sshll.u32 %s2007, 4
          %s2018 = int_to_ptr.vmem [resolvable:$true] %s2017
          %2020 = dma.vmem_to_hbm [thread:$0]  %s2018, 128, %s2015, %s2004
        $region64: #{tpu_custom_call.1} parent=59 // pred_fallthru
          _
      $region60: #{tpu_custom_call.1} parent=5 // pred_fallthru
        _
      %p2021 = scmp.le.s32.totalorder 2, %s19
      // Predicated region
      $region65: #{tpu_custom_call.1} parent=5 // pred_check
        %p2022 = pneg %p2021
      $region66: #{tpu_custom_call.1} parent=5 // pred_check_branch
        %2024 = sbr.rel (%p2022) target = $region68
      $region67: #{tpu_custom_call.1} parent=5 // pred_region
        %s2025 = ssub.s32 %s19, 2
        // Predicated region
        $region69: #{tpu_custom_call.1} parent=67 // pred_check
          %p2026 = pneg %p263
        $region70: #{tpu_custom_call.1} parent=67 // pred_check_branch
          %2028 = sbr.rel (%p2026) target = $region72
        $region71: #{tpu_custom_call.1} parent=67 // pred_region
          %s2029 = sand.u32 %s248, 1
          %s2030 = scalar_lea.sflag [#allocation3], %s2029
          %s2031 = sand.u32 %s248, 1
          %s2032 = smul.addr %s2031, 8
          %s2033 = scalar_lea.vmem [#allocation2], %s2032
          %2034 = dma.done %s2030, 128
        $region72: #{tpu_custom_call.1} parent=67 // pred_fallthru
          _
      $region68: #{tpu_custom_call.1} parent=5 // pred_fallthru
        _
    $region6: #{tpu_custom_call.1} parent=1 // loop_footer
      %s23 = sadd.s32 1, %s19
    $region7: #{tpu_custom_call.1} parent=1 // loop_footer_branch
      %18 = sbr.rel target = $region3
    $region8: #{tpu_custom_call.1} parent=1 // loop_exit
      _
    %2035 = vsyncpa [#allocation3], 1
    %s2036 = scalar_lea.sflag [#allocation3], 1
    %2037 = vsyncpa %s2036, 1

</llo_original>
